<compile_context>
chip_gen: v7x
topology: tpu7x:2x2x1
jax: 0.10.0
libtpu: 0.0.40
codegen_flags: <defaults>
</compile_context>

<pallas_src>
import math

import jax
import jax.numpy as jnp
import numpy as np
from jax.experimental import pallas as pl
from jax.experimental.pallas import tpu as pltpu


# ----------------------------------------------------------------------------
# Fused Pallas kernel: whole Attention_block forward for one (batch, spatial) tile
# ----------------------------------------------------------------------------
def _attention_block_kernel(g_ref, x_ref, wgt_ref, wxt_ref, b_ref, wpsi_ref,
                            bpsi_ref, o_ref):
    g = g_ref[...]                                   # (F_g, tm) f32, lane-dense
    x = x_ref[...]                                   # (F_l, tm) f32, lane-dense

    # 1x1 convs (BN folded): channel matmuls on the MXU, f32 accumulation.
    g1 = jnp.dot(wgt_ref[...], g, preferred_element_type=jnp.float32)   # (F_int, tm)
    x1 = jnp.dot(wxt_ref[...], x, preferred_element_type=jnp.float32)   # (F_int, tm)
    h = jnp.maximum(g1 + x1 + b_ref[...], 0.0)       # ReLU, single fused bias (F_int, tm)

    # psi conv has one output channel -> VPU multiply + sublane reduce (XLU),
    # then the sigmoid runs on a dense (1, tm) row (exp + reciprocal on the EUP).
    logit = jnp.sum(h * wpsi_ref[...], axis=0, keepdims=True) + bpsi_ref[0]
    psi = pl.reciprocal(1.0 + jnp.exp(-logit), approx=True)             # (1, tm)

    o_ref[...] = (x * psi).astype(o_ref.dtype)       # gate the skip connection


def _pick_tm(M, target):
    """Largest lane tile <= target that divides M and is a multiple of 128."""
    if M <= target:
        return M                       # full-dim block (always legal)
    t = (min(target, M) // 128) * 128
    while t >= 128:
        if M % t == 0:
            return t
        t -= 128
    return M                           # no 128-multiple divides M: one full block


def attention_block_pallas(g, x, folded_params, *, tm_target=8192):
    """g: (N, F_g, D, H, W) f32, x: (N, F_l, D, H, W) f32 -> (N, F_l, D, H, W) f32.

    Native PyTorch NCDHW layout (channels on sublanes, spatial on lanes).
    """
    N, F_g, D, H, W = g.shape
    assert x.shape[0] == N and x.shape[2:] == (D, H, W)
    F_l = x.shape[1]

    wgt, wxt, b_sum, wpsi, bpsi = folded_params
    F_int = wgt.shape[0]
    assert wgt.shape == (F_int, F_g) and wxt.shape == (F_int, F_l)
    assert b_sum.shape == (F_int, 1) and wpsi.shape == (F_int, 1) and bpsi.shape == (1,)

    M = D * H * W
    g3 = g.reshape(N, F_g, M)          # contiguous reshapes: no copy, no pad
    x3 = x.reshape(N, F_l, M)

    tm = _pick_tm(M, tm_target)
    # Keep >= ~4 grid steps so both v7x TensorCores (and the pipeline) stay busy.
    while N * (M // tm) < 4 and tm % 256 == 0 and tm >= 512 and M % (tm // 2) == 0:
        tm //= 2

    grid = (N, M // tm)

    cost = pl.CostEstimate(
        flops=2 * N * M * (F_g + F_l + 1) * F_int,
        bytes_accessed=4 * N * M * (F_g + 2 * F_l),
        transcendentals=N * M,
    )

    out = pl.pallas_call(
        _attention_block_kernel,
        out_shape=jax.ShapeDtypeStruct((N, F_l, M), x.dtype),
        grid_spec=pltpu.PrefetchScalarGridSpec(
            num_scalar_prefetch=0,
            grid=grid,
            in_specs=[
                pl.BlockSpec((None, F_g, tm), lambda n, i: (n, 0, i)),   # g tile
                pl.BlockSpec((None, F_l, tm), lambda n, i: (n, 0, i)),   # x tile
                pl.BlockSpec((F_int, F_g), lambda n, i: (0, 0)),         # Wg^T (resident)
                pl.BlockSpec((F_int, F_l), lambda n, i: (0, 0)),         # Wx^T (resident)
                pl.BlockSpec((F_int, 1), lambda n, i: (0, 0)),           # bg + bx column
                pl.BlockSpec((F_int, 1), lambda n, i: (0, 0)),           # wpsi column
                pl.BlockSpec(memory_space=pltpu.MemorySpace.SMEM),       # bpsi scalar
            ],
            out_specs=pl.BlockSpec((None, F_l, tm), lambda n, i: (n, 0, i)),
        ),
        compiler_params=pltpu.CompilerParams(
            dimension_semantics=("parallel", "parallel")),
        cost_estimate=cost,
    )(g3, x3, wgt, wxt, b_sum, wpsi, bpsi)

    return out.reshape(N, F_l, D, H, W)


# ----------------------------------------------------------------------------
# Parameter init (PyTorch-like) and Conv+BN (eval-mode) folding
# ----------------------------------------------------------------------------
def init_raw_params(key, F_g, F_l, F_int):
    """Raw per-branch params: (conv_w (Cin,Cout), conv_b, gamma, beta, run_mean, run_var)."""
    def conv1x1(k, cin, cout):
        k1, k2 = jax.random.split(k)
        bound = 1.0 / math.sqrt(cin)                      # PyTorch default (kernel=1)
        w = jax.random.uniform(k1, (cin, cout), jnp.float32, -bound, bound)
        b = jax.random.uniform(k2, (cout,), jnp.float32, -bound, bound)
        return w, b

    def bn(k, c):                                         # non-trivial "running" stats
        k1, k2, k3, k4 = jax.random.split(k, 4)
        gamma = jax.random.uniform(k1, (c,), jnp.float32, 0.5, 1.5)
        beta = jax.random.uniform(k2, (c,), jnp.float32, -0.3, 0.3)
        mean = 0.1 * jax.random.normal(k3, (c,), jnp.float32)
        var = jax.random.uniform(k4, (c,), jnp.float32, 0.5, 1.5)
        return gamma, beta, mean, var

    ks = jax.random.split(key, 6)
    return {
        "W_g": conv1x1(ks[0], F_g, F_int) + bn(ks[1], F_int),
        "W_x": conv1x1(ks[2], F_l, F_int) + bn(ks[3], F_int),
        "psi": conv1x1(ks[4], F_int, 1) + bn(ks[5], 1),
    }


def fold_params(raw, eps=1e-5):
    """Fold eval-mode BN into the 1x1 convs; return kernel-ready (C-out, C-in) arrays."""
    def fold(w, b, gamma, beta, mean, var):
        scale = gamma / jnp.sqrt(var + eps)
        return w * scale[None, :], (b - mean) * scale + beta

    wg, bg = fold(*raw["W_g"])            # (F_g, F_int), (F_int,)
    wx, bx = fold(*raw["W_x"])            # (F_l, F_int), (F_int,)
    wp, bp = fold(*raw["psi"])            # (F_int, 1),   (1,)
    F_int = wg.shape[1]
    return (wg.T,                          # (F_int, F_g)  for g1 = Wg^T @ G
            wx.T,                          # (F_int, F_l)  for x1 = Wx^T @ X
            (bg + bx).reshape(F_int, 1),   # fused bias column (added once)
            wp.reshape(F_int, 1),          # psi weight column (sublane reduce)
            bp.reshape(1,))                # psi bias scalar -> SMEM


# ----------------------------------------------------------------------------
# Pure-JAX reference (unfolded BN, NCDHW) for correctness check
# ----------------------------------------------------------------------------
def _reference_forward(g, x, raw, eps=1e-5):
    def conv_bn(inp, w, b, gamma, beta, mean, var):
        y = jnp.einsum("ncdhw,co->nodhw", inp, w) + b[None, :, None, None, None]
        return (gamma[None, :, None, None, None]
                * (y - mean[None, :, None, None, None])
                / jnp.sqrt(var[None, :, None, None, None] + eps)
                + beta[None, :, None, None, None])

    g1 = conv_bn(g, *raw["W_g"])
    x1 = conv_bn(x, *raw["W_x"])
    h = jnp.maximum(g1 + x1, 0.0)
    psi = jax.nn.sigmoid(conv_bn(h, *raw["psi"]))   # (N, 1, D, H, W)
    return x * psi


if __name__ == "__main__":
    key = jax.random.PRNGKey(0)
    kg, kx, kp = jax.random.split(key, 3)

    # Small shapes in PyTorch NCDHW layout: g [2, 32, 16, 16, 16], x [2, 24, 16, 16, 16].
    N, D, H, W = 2, 16, 16, 16
    F_g, F_l, F_int = 32, 24, 16

    g = jax.random.normal(kg, (N, F_g, D, H, W), jnp.float32)
    x = jax.random.normal(kx, (N, F_l, D, H, W), jnp.float32)

    raw = init_raw_params(kp, F_g, F_l, F_int)
    folded = fold_params(raw)

    out = attention_block_pallas(g, x, folded)
    out = jax.block_until_ready(out)
    assert out.shape == (N, F_l, D, H, W), out.shape

    ref = jax.block_until_ready(_reference_forward(g, x, raw))
    np.testing.assert_allclose(np.asarray(out), np.asarray(ref),
                               rtol=5e-3, atol=5e-3)

    print("KERNEL_OK")
</pallas_src>

<mosaic_0001>
module attributes {stable_mosaic.version = 11 : i64} {
  func.func @_attention_block_kernel(%arg0: i32, %arg1: i32, %arg2: memref<1x32x2048xf32, #tpu.memory_space<vmem>>, %arg3: memref<1x24x2048xf32, #tpu.memory_space<vmem>>, %arg4: memref<16x32xf32, #tpu.memory_space<vmem>>, %arg5: memref<16x24xf32, #tpu.memory_space<vmem>>, %arg6: memref<16x1xf32, #tpu.memory_space<vmem>>, %arg7: memref<16x1xf32, #tpu.memory_space<vmem>>, %arg8: memref<1xf32, #tpu.memory_space<smem>>, %arg9: memref<1x24x2048xf32, #tpu.memory_space<vmem>>) attributes {dimension_semantics = [#tpu.dimension_semantics<parallel>, #tpu.dimension_semantics<parallel>], iteration_bounds = array<i64: 2, 2>, scalar_prefetch = 0 : i64, scratch_operands = 0 : i64, tpu.core_type = #tpu.core_type<tc>, window_params = [{transform_indices = @transform_0, window_bounds = array<i64: 1, 32, 2048>}, {transform_indices = @transform_1, window_bounds = array<i64: 1, 24, 2048>}, {pipeline_mode = #tpu.pipeline_mode<synchronous>, transform_indices = @transform_2, window_bounds = array<i64: 16, 32>}, {pipeline_mode = #tpu.pipeline_mode<synchronous>, transform_indices = @transform_3, window_bounds = array<i64: 16, 24>}, {pipeline_mode = #tpu.pipeline_mode<synchronous>, transform_indices = @transform_4, window_bounds = array<i64: 16, 1>}, {pipeline_mode = #tpu.pipeline_mode<synchronous>, transform_indices = @transform_5, window_bounds = array<i64: 16, 1>}, {transform_indices = @transform_6, window_bounds = array<i64: 1>}, {transform_indices = @transform_7, window_bounds = array<i64: 1, 24, 2048>}]} {
    %c0 = arith.constant 0 : index
    %c0_0 = arith.constant 0 : index
    %c0_1 = arith.constant 0 : index
    %0 = vector.load %arg2[%c0, %c0_0, %c0_1] : memref<1x32x2048xf32, #tpu.memory_space<vmem>>, vector<1x32x2048xf32>
    %1 = vector.shape_cast %0 : vector<1x32x2048xf32> to vector<32x2048xf32>
    %c0_2 = arith.constant 0 : index
    %c0_3 = arith.constant 0 : index
    %c0_4 = arith.constant 0 : index
    %2 = vector.load %arg3[%c0_2, %c0_3, %c0_4] : memref<1x24x2048xf32, #tpu.memory_space<vmem>>, vector<1x24x2048xf32>
    %3 = vector.shape_cast %2 : vector<1x24x2048xf32> to vector<24x2048xf32>
    %c0_5 = arith.constant 0 : index
    %c0_6 = arith.constant 0 : index
    %4 = vector.load %arg4[%c0_5, %c0_6] : memref<16x32xf32, #tpu.memory_space<vmem>>, vector<16x32xf32>
    %cst = arith.constant dense<0.000000e+00> : vector<16x2048xf32>
    %5 = tpu.matmul %4, %1, %cst {dimension_numbers = #tpu.dot_dimension_numbers<[1], [0], [0], [1], [0, 0, 1, 1], [], []>} : vector<16x32xf32>, vector<32x2048xf32>, vector<16x2048xf32> -> vector<16x2048xf32>
    %c0_7 = arith.constant 0 : index
    %c0_8 = arith.constant 0 : index
    %6 = vector.load %arg5[%c0_7, %c0_8] : memref<16x24xf32, #tpu.memory_space<vmem>>, vector<16x24xf32>
    %cst_9 = arith.constant dense<0.000000e+00> : vector<16x2048xf32>
    %7 = tpu.matmul %6, %3, %cst_9 {dimension_numbers = #tpu.dot_dimension_numbers<[1], [0], [0], [1], [0, 0, 1, 1], [], []>} : vector<16x24xf32>, vector<24x2048xf32>, vector<16x2048xf32> -> vector<16x2048xf32>
    %8 = arith.addf %5, %7 : vector<16x2048xf32>
    %c0_10 = arith.constant 0 : index
    %c0_11 = arith.constant 0 : index
    %9 = vector.load %arg6[%c0_10, %c0_11] : memref<16x1xf32, #tpu.memory_space<vmem>>, vector<16x1xf32>
    %10 = vector.broadcast %9 : vector<16x1xf32> to vector<16x2048xf32>
    %11 = arith.addf %8, %10 : vector<16x2048xf32>
    %cst_12 = arith.constant 0.000000e+00 : f32
    %12 = vector.broadcast %cst_12 : f32 to vector<16x2048xf32>
    %13 = arith.maximumf %11, %12 : vector<16x2048xf32>
    %c0_13 = arith.constant 0 : index
    %c0_14 = arith.constant 0 : index
    %14 = vector.load %arg7[%c0_13, %c0_14] : memref<16x1xf32, #tpu.memory_space<vmem>>, vector<16x1xf32>
    %15 = vector.broadcast %14 : vector<16x1xf32> to vector<16x2048xf32>
    %16 = arith.mulf %13, %15 : vector<16x2048xf32>
    %cst_15 = arith.constant dense<0.000000e+00> : vector<2048xf32>
    %17 = vector.multi_reduction <add>, %16, %cst_15 [0] : vector<16x2048xf32> to vector<2048xf32>
    %18 = vector.shape_cast %17 : vector<2048xf32> to vector<1x2048xf32>
    %c0_16 = arith.constant 0 : index
    %19 = memref.load %arg8[%c0_16] : memref<1xf32, #tpu.memory_space<smem>>
    %20 = vector.broadcast %19 : f32 to vector<1x2048xf32>
    %21 = arith.addf %18, %20 : vector<1x2048xf32>
    %cst_17 = arith.constant 0.000000e+00 : f32
    %22 = vector.broadcast %cst_17 : f32 to vector<1x2048xf32>
    %23 = arith.subf %22, %21 : vector<1x2048xf32>
    %24 = math.exp %23 : vector<1x2048xf32>
    %cst_18 = arith.constant 1.000000e+00 : f32
    %25 = vector.broadcast %cst_18 : f32 to vector<1x2048xf32>
    %26 = arith.addf %25, %24 : vector<1x2048xf32>
    %27 = tpu.reciprocal %26 {approx = true} : vector<1x2048xf32> -> vector<1x2048xf32>
    %28 = vector.broadcast %27 : vector<1x2048xf32> to vector<24x2048xf32>
    %29 = arith.mulf %3, %28 : vector<24x2048xf32>
    %c0_19 = arith.constant 0 : index
    %c0_20 = arith.constant 0 : index
    %c0_21 = arith.constant 0 : index
    %30 = vector.load %arg9[%c0_19, %c0_20, %c0_21] : memref<1x24x2048xf32, #tpu.memory_space<vmem>>, vector<1x24x2048xf32>
    %31 = vector.shape_cast %30 : vector<1x24x2048xf32> to vector<24x2048xf32>
    %32 = vector.shape_cast %29 : vector<24x2048xf32> to vector<1x24x2048xf32>
    tpu.vector_store %arg9[%c0_19, %c0_20, %c0_21], %32 {strides = array<i32>} : memref<1x24x2048xf32, #tpu.memory_space<vmem>>, vector<1x24x2048xf32>,
    return
  }
  func.func @transform_0(%arg0: i32, %arg1: i32) -> (i32, i32, i32) {
    %c0_i32 = arith.constant 0 : i32
    %c0_i32_0 = arith.constant 0 : i32
    return %arg0, %c0_i32, %arg1 : i32, i32, i32
  }
  func.func @transform_1(%arg0: i32, %arg1: i32) -> (i32, i32, i32) {
    %c0_i32 = arith.constant 0 : i32
    %c0_i32_0 = arith.constant 0 : i32
    return %arg0, %c0_i32, %arg1 : i32, i32, i32
  }
  func.func @transform_2(%arg0: i32, %arg1: i32) -> (i32, i32) {
    %c0_i32 = arith.constant 0 : i32
    %c0_i32_0 = arith.constant 0 : i32
    %c0_i32_1 = arith.constant 0 : i32
    return %c0_i32, %c0_i32_0 : i32, i32
  }
  func.func @transform_3(%arg0: i32, %arg1: i32) -> (i32, i32) {
    %c0_i32 = arith.constant 0 : i32
    %c0_i32_0 = arith.constant 0 : i32
    %c0_i32_1 = arith.constant 0 : i32
    return %c0_i32, %c0_i32_0 : i32, i32
  }
  func.func @transform_4(%arg0: i32, %arg1: i32) -> (i32, i32) {
    %c0_i32 = arith.constant 0 : i32
    %c0_i32_0 = arith.constant 0 : i32
    %c0_i32_1 = arith.constant 0 : i32
    return %c0_i32, %c0_i32_0 : i32, i32
  }
  func.func @transform_5(%arg0: i32, %arg1: i32) -> (i32, i32) {
    %c0_i32 = arith.constant 0 : i32
    %c0_i32_0 = arith.constant 0 : i32
    %c0_i32_1 = arith.constant 0 : i32
    return %c0_i32, %c0_i32_0 : i32, i32
  }
  func.func @transform_6(%arg0: i32, %arg1: i32) -> i32 {
    %c0_i32 = arith.constant 0 : i32
    %c0_i32_0 = arith.constant 0 : i32
    return %c0_i32 : i32
  }
  func.func @transform_7(%arg0: i32, %arg1: i32) -> (i32, i32, i32) {
    %c0_i32 = arith.constant 0 : i32
    %c0_i32_0 = arith.constant 0 : i32
    return %arg0, %c0_i32, %arg1 : i32, i32, i32
  }
}

</mosaic_0001>

<llo_original>
// kernel: tpu_custom_call.1
$region0: #{tpu_custom_call.1}
  #allocation0 [shape = 'u32[]', space=smem, size = 0x4, offset = 0x4, fixed_abs, tag = 'smem constant byte address 0x4 - core index']
  #allocation1 [shape = 'u32[144,128]{1,0:T(1,128)}', space=vmem, size = 0x12000, scoped, tag = 'internal scratch']
  #allocation2 [shape = 'f32[1]{0:T(128)S(6)}', space=smem, size = 0x200, scoped, tag = 'scoped memory for tpu_custom_call.1']
  %s0 = inlined_call_operand.hbm [shape: f32[2,32,4096], index: 0, kind: input, shape index: {}]
  %s1 = inlined_call_operand.hbm [shape: f32[2,24,4096], index: 1, kind: input, shape index: {}]
  %s2 = inlined_call_operand.vmem [shape: f32[16,32], index: 2, kind: input, shape index: {}]
  %s3 = inlined_call_operand.vmem [shape: f32[16,24], index: 3, kind: input, shape index: {}]
  %s4 = inlined_call_operand.vmem [shape: f32[16,1], index: 4, kind: input, shape index: {}]
  %s5 = inlined_call_operand.vmem [shape: f32[16,1], index: 5, kind: input, shape index: {}]
  %s6 = inlined_call_operand.<no memory space> [shape: f32[1], index: 6, kind: input, shape index: {}]
  %s7 = inlined_call_operand.hbm [shape: f32[2,24,4096], index: 7, kind: output, shape index: {}]
  %s8 = sld [smem:[#allocation0]]
  $region69: #{tpu_custom_call.1} parent=0
    _
  %s10 = ssub.s32 1, %s8
  %s11 = scalar_select 0, %s10, %s8
  %12 = sst [smem:[#allocation2]] %s6
  $region1: #{tpu_custom_call.1} parent=0
    #allocation3 [shape = 'u8[524288]{0}', space=vmem, size = 0x80000, scoped, tag = 'input window, operand 0']
    #allocation4 [shape = 's32[2]{0}', space=sflag, size = 0x8, scoped, tag = 'scoped memory for tpu_custom_call.1']
    #allocation5 [shape = 's32[2]{0}', space=sflag, size = 0x8, scoped, tag = 'scoped memory for tpu_custom_call.1']
    #allocation6 [shape = 'u8[393216]{0}', space=vmem, size = 0x60000, scoped, tag = 'input window, operand 1']
    #allocation7 [shape = 's32[2]{0}', space=sflag, size = 0x8, scoped, tag = 'scoped memory for tpu_custom_call.1']
    #allocation8 [shape = 'u8[393216]{0}', space=vmem, size = 0x60000, scoped, tag = 'output window, operand 0']
    %13 = vsyncpa [#allocation4], 0
    %s14 = scalar_lea.sflag [#allocation4], 1
    %15 = vsyncpa %s14, 0
    %16 = vsyncpa [#allocation7], 0
    %s17 = scalar_lea.sflag [#allocation7], 1
    %18 = vsyncpa %s17, 0
    %19 = vsyncpa [#allocation5], 0
    %s20 = scalar_lea.sflag [#allocation5], 1
    %21 = vsyncpa %s20, 0
    loop: start=0, step=1, limit=6
    $region2: #{tpu_custom_call.1} parent=1 // loop_pre_header
      _
    $region3: #{tpu_custom_call.1} parent=1 // loop_header
      %s23 = sphi 0, %s27
      %p24 = scmp.ge.s32.totalorder %s23, 6
      %s30 = sphi 0, %s42
      %s31 = sphi 0, %s38
      %s32 = sphi 0, %s30
      %s33 = sphi 0, %s31
      %s34 = sphi 0, %s32
      %s35 = sphi 0, %s33
      %s47 = sphi 0, %s49
      %s50 = sphi 0, %s47
      %s51 = sphi 0, %s50
      %s67 = sphi 0, %s51
      %s75 = sphi 0, %s77
      %s78 = sphi 0, %s75
      %s79 = sphi 0, %s78
      %s95 = sphi 0, %s79
      %s99 = sphi 0, %s99
      %s101 = sphi 0, %s99
      %s102 = sphi 0, %s101
      %s116 = sphi 0, %s102
      %s120 = sphi 0, %s120
      %s122 = sphi 0, %s120
      %s123 = sphi 0, %s122
      %s137 = sphi 0, %s123
      %s141 = sphi 0, %s141
      %s143 = sphi 0, %s141
      %s144 = sphi 0, %s143
      %s158 = sphi 0, %s144
      %s162 = sphi 0, %s162
      %s164 = sphi 0, %s162
      %s165 = sphi 0, %s164
      %s179 = sphi 0, %s165
      %s183 = sphi 0, %s183
      %s185 = sphi 0, %s183
      %s186 = sphi 0, %s185
      %s200 = sphi 0, %s186
      %s208 = sphi 0, %s210
      %s211 = sphi 0, %s208
      %s212 = sphi 0, %s211
      %s228 = sphi 0, %s212
    $region4: #{tpu_custom_call.1} parent=1 // loop_header_branch
      %26 = sbr.rel (%p24) target = $region8
    $region5: #{tpu_custom_call.1} parent=1 // loop_body
      %s28 = ssub.s32 %s23, 1
      %s29 = ssub.s32 %s23, 2
      %s36 = sadd.s32 1, %s31
      %p37 = scmp.ge.s32.totalorder %s36, 2
      %s38 = scalar_select %p37, 0, %s36
      %s39 = sadd.s32 1, %s30
      %s40 = scalar_select %p37, %s39, %s30
      %p41 = scmp.ge.s32.totalorder %s40, 2
      %s42 = scalar_select %p41, 0, %s40
      %s43 = ssub.s32 %s30, %s42
      %s44 = ssub.s32 %s31, %s38
      %s45 = sor.u32 %s43, %s44
      %p46 = scmp.eq.s32.totalorder %s45, 0
      %s48 = sadd.s32 %s47, 1
      %s49 = scalar_select %p46, %s47, %s48
      %p52 = pneg %p46
      %p53 = scmp.eq.s32.totalorder %s23, 3
      %p54 = por %p52, %p53
      %p55 = scmp.ne.s32.totalorder %s47, %s50
      %p56 = scmp.eq.s32.totalorder %s23, 0
      %p57 = por %p55, %p56
      %p58 = scmp.ne.s32.totalorder %s47, %s50
      %p59 = scmp.eq.s32.totalorder %s28, 3
      %p60 = por %p58, %p59
      %p61 = scmp.ne.s32.totalorder %s50, %s51
      %p62 = scmp.eq.s32.totalorder %s28, 0
      %p63 = por %p61, %p62
      %p64 = scmp.ne.s32.totalorder %s50, %s51
      %p65 = scmp.eq.s32.totalorder %s29, 3
      %p66 = por %p64, %p65
      %p68 = scmp.ne.s32.totalorder %s51, %s67
      %p69 = scmp.eq.s32.totalorder %s29, 0
      %p70 = por %p68, %p69
      %s71 = ssub.s32 %s30, %s42
      %s72 = ssub.s32 %s31, %s38
      %s73 = sor.u32 %s71, %s72
      %p74 = scmp.eq.s32.totalorder %s73, 0
      %s76 = sadd.s32 %s75, 1
      %s77 = scalar_select %p74, %s75, %s76
      %p80 = pneg %p74
      %p81 = scmp.eq.s32.totalorder %s23, 3
      %p82 = por %p80, %p81
      %p83 = scmp.ne.s32.totalorder %s75, %s78
      %p84 = scmp.eq.s32.totalorder %s23, 0
      %p85 = por %p83, %p84
      %p86 = scmp.ne.s32.totalorder %s75, %s78
      %p87 = scmp.eq.s32.totalorder %s28, 3
      %p88 = por %p86, %p87
      %p89 = scmp.ne.s32.totalorder %s78, %s79
      %p90 = scmp.eq.s32.totalorder %s28, 0
      %p91 = por %p89, %p90
      %p92 = scmp.ne.s32.totalorder %s78, %s79
      %p93 = scmp.eq.s32.totalorder %s29, 3
      %p94 = por %p92, %p93
      %p96 = scmp.ne.s32.totalorder %s79, %s95
      %p97 = scmp.eq.s32.totalorder %s29, 0
      %p98 = por %p96, %p97
      %s100 = sadd.s32 %s99, 1
      %p103 = scmp.eq.s32.totalorder %s23, 3
      %p104 = scmp.ne.s32.totalorder %s99, %s101
      %p105 = scmp.eq.s32.totalorder %s23, 0
      %p106 = por %p104, %p105
      %p107 = scmp.ne.s32.totalorder %s99, %s101
      %p108 = scmp.eq.s32.totalorder %s28, 3
      %p109 = por %p107, %p108
      %p110 = scmp.ne.s32.totalorder %s101, %s102
      %p111 = scmp.eq.s32.totalorder %s28, 0
      %p112 = por %p110, %p111
      %p113 = scmp.ne.s32.totalorder %s101, %s102
      %p114 = scmp.eq.s32.totalorder %s29, 3
      %p115 = por %p113, %p114
      %p117 = scmp.ne.s32.totalorder %s102, %s116
      %p118 = scmp.eq.s32.totalorder %s29, 0
      %p119 = por %p117, %p118
      %s121 = sadd.s32 %s120, 1
      %p124 = scmp.eq.s32.totalorder %s23, 3
      %p125 = scmp.ne.s32.totalorder %s120, %s122
      %p126 = scmp.eq.s32.totalorder %s23, 0
      %p127 = por %p125, %p126
      %p128 = scmp.ne.s32.totalorder %s120, %s122
      %p129 = scmp.eq.s32.totalorder %s28, 3
      %p130 = por %p128, %p129
      %p131 = scmp.ne.s32.totalorder %s122, %s123
      %p132 = scmp.eq.s32.totalorder %s28, 0
      %p133 = por %p131, %p132
      %p134 = scmp.ne.s32.totalorder %s122, %s123
      %p135 = scmp.eq.s32.totalorder %s29, 3
      %p136 = por %p134, %p135
      %p138 = scmp.ne.s32.totalorder %s123, %s137
      %p139 = scmp.eq.s32.totalorder %s29, 0
      %p140 = por %p138, %p139
      %s142 = sadd.s32 %s141, 1
      %p145 = scmp.eq.s32.totalorder %s23, 3
      %p146 = scmp.ne.s32.totalorder %s141, %s143
      %p147 = scmp.eq.s32.totalorder %s23, 0
      %p148 = por %p146, %p147
      %p149 = scmp.ne.s32.totalorder %s141, %s143
      %p150 = scmp.eq.s32.totalorder %s28, 3
      %p151 = por %p149, %p150
      %p152 = scmp.ne.s32.totalorder %s143, %s144
      %p153 = scmp.eq.s32.totalorder %s28, 0
      %p154 = por %p152, %p153
      %p155 = scmp.ne.s32.totalorder %s143, %s144
      %p156 = scmp.eq.s32.totalorder %s29, 3
      %p157 = por %p155, %p156
      %p159 = scmp.ne.s32.totalorder %s144, %s158
      %p160 = scmp.eq.s32.totalorder %s29, 0
      %p161 = por %p159, %p160
      %s163 = sadd.s32 %s162, 1
      %p166 = scmp.eq.s32.totalorder %s23, 3
      %p167 = scmp.ne.s32.totalorder %s162, %s164
      %p168 = scmp.eq.s32.totalorder %s23, 0
      %p169 = por %p167, %p168
      %p170 = scmp.ne.s32.totalorder %s162, %s164
      %p171 = scmp.eq.s32.totalorder %s28, 3
      %p172 = por %p170, %p171
      %p173 = scmp.ne.s32.totalorder %s164, %s165
      %p174 = scmp.eq.s32.totalorder %s28, 0
      %p175 = por %p173, %p174
      %p176 = scmp.ne.s32.totalorder %s164, %s165
      %p177 = scmp.eq.s32.totalorder %s29, 3
      %p178 = por %p176, %p177
      %p180 = scmp.ne.s32.totalorder %s165, %s179
      %p181 = scmp.eq.s32.totalorder %s29, 0
      %p182 = por %p180, %p181
      %s184 = sadd.s32 %s183, 1
      %p187 = scmp.eq.s32.totalorder %s23, 3
      %p188 = scmp.ne.s32.totalorder %s183, %s185
      %p189 = scmp.eq.s32.totalorder %s23, 0
      %p190 = por %p188, %p189
      %p191 = scmp.ne.s32.totalorder %s183, %s185
      %p192 = scmp.eq.s32.totalorder %s28, 3
      %p193 = por %p191, %p192
      %p194 = scmp.ne.s32.totalorder %s185, %s186
      %p195 = scmp.eq.s32.totalorder %s28, 0
      %p196 = por %p194, %p195
      %p197 = scmp.ne.s32.totalorder %s185, %s186
      %p198 = scmp.eq.s32.totalorder %s29, 3
      %p199 = por %p197, %p198
      %p201 = scmp.ne.s32.totalorder %s186, %s200
      %p202 = scmp.eq.s32.totalorder %s29, 0
      %p203 = por %p201, %p202
      %s204 = ssub.s32 %s30, %s42
      %s205 = ssub.s32 %s31, %s38
      %s206 = sor.u32 %s204, %s205
      %p207 = scmp.eq.s32.totalorder %s206, 0
      %s209 = sadd.s32 %s208, 1
      %s210 = scalar_select %p207, %s208, %s209
      %p213 = pneg %p207
      %p214 = scmp.eq.s32.totalorder %s23, 3
      %p215 = por %p213, %p214
      %p216 = scmp.ne.s32.totalorder %s208, %s211
      %p217 = scmp.eq.s32.totalorder %s23, 0
      %p218 = por %p216, %p217
      %p219 = scmp.ne.s32.totalorder %s208, %s211
      %p220 = scmp.eq.s32.totalorder %s28, 3
      %p221 = por %p219, %p220
      %p222 = scmp.ne.s32.totalorder %s211, %s212
      %p223 = scmp.eq.s32.totalorder %s28, 0
      %p224 = por %p222, %p223
      %p225 = scmp.ne.s32.totalorder %s211, %s212
      %p226 = scmp.eq.s32.totalorder %s29, 3
      %p227 = por %p225, %p226
      %p229 = scmp.ne.s32.totalorder %s212, %s228
      %p230 = scmp.eq.s32.totalorder %s29, 0
      %p231 = por %p229, %p230
      %p232 = scmp.le.s32.totalorder 1, %s23
      %p233 = scmp.lt.s32.totalorder %s23, 5
      %p234 = pnand %p232, %p233
      %p235 = pneg %p234
      // Predicated region
      $region9: #{tpu_custom_call.1} parent=5 // pred_check
        _
      $region10: #{tpu_custom_call.1} parent=5 // pred_check_branch
        %237 = sbr.rel (%p234) target = $region12
      $region11: #{tpu_custom_call.1} parent=5 // pred_region
        %s238 = ssub.s32 %s23, 1
        // Predicated region
        $region13: #{tpu_custom_call.1} parent=11 // pred_check
          %p239 = pneg %p112
        $region14: #{tpu_custom_call.1} parent=11 // pred_check_branch
          %241 = sbr.rel (%p239) target = $region16
        $region15: #{tpu_custom_call.1} parent=11 // pred_region
          _
        $region16: #{tpu_custom_call.1} parent=11 // pred_fallthru
          _
        // Predicated region
        $region17: #{tpu_custom_call.1} parent=11 // pred_check
          %p242 = pneg %p133
        $region18: #{tpu_custom_call.1} parent=11 // pred_check_branch
          %244 = sbr.rel (%p242) target = $region20
        $region19: #{tpu_custom_call.1} parent=11 // pred_region
          _
        $region20: #{tpu_custom_call.1} parent=11 // pred_fallthru
          _
        // Predicated region
        $region21: #{tpu_custom_call.1} parent=11 // pred_check
          %p245 = pneg %p154
        $region22: #{tpu_custom_call.1} parent=11 // pred_check_branch
          %247 = sbr.rel (%p245) target = $region24
        $region23: #{tpu_custom_call.1} parent=11 // pred_region
          _
        $region24: #{tpu_custom_call.1} parent=11 // pred_fallthru
          _
        // Predicated region
        $region25: #{tpu_custom_call.1} parent=11 // pred_check
          %p248 = pneg %p175
        $region26: #{tpu_custom_call.1} parent=11 // pred_check_branch
          %250 = sbr.rel (%p248) target = $region28
        $region27: #{tpu_custom_call.1} parent=11 // pred_region
          _
        $region28: #{tpu_custom_call.1} parent=11 // pred_fallthru
          _
        // Predicated region
        $region29: #{tpu_custom_call.1} parent=11 // pred_check
          %p251 = pneg %p196
        $region30: #{tpu_custom_call.1} parent=11 // pred_check_branch
          %253 = sbr.rel (%p251) target = $region32
        $region31: #{tpu_custom_call.1} parent=11 // pred_region
          _
        $region32: #{tpu_custom_call.1} parent=11 // pred_fallthru
          _
      $region12: #{tpu_custom_call.1} parent=5 // pred_fallthru
        _
      %p254 = scmp.lt.s32.totalorder %s23, 4
      // Predicated region
      $region33: #{tpu_custom_call.1} parent=5 // pred_check
        %p255 = pneg %p254
      $region34: #{tpu_custom_call.1} parent=5 // pred_check_branch
        %257 = sbr.rel (%p255) target = $region36
      $region35: #{tpu_custom_call.1} parent=5 // pred_region
        // Predicated region
        $region37: #{tpu_custom_call.1} parent=35 // pred_check
          %p258 = pneg %p57
        $region38: #{tpu_custom_call.1} parent=35 // pred_check_branch
          %260 = sbr.rel (%p258) target = $region40
        $region39: #{tpu_custom_call.1} parent=35 // pred_region
          %s261 = sand.u32 %s47, 1
          %s262 = scalar_lea.sflag [#allocation4], %s261
          %s263 = sand.u32 %s47, 1
          %s264 = smul.addr %s263, 512
          %s265 = scalar_lea.vmem [#allocation3], %s264
          %s266 = smul.u32 16, %s31
          %s268 = ssub.s32 8192, 8192
          %269 = vsyncadd %s262, %s268
          %s270 = smul.addr %s30, 128
          %s271 = sadd.s32 %s266, %s270
          %s272 = smul.addr %s271, 128
          %s273 = scalar_lea.hbm %s0, %s272
          %s274 = sshll.u32 %s265, 4
          %s275 = int_to_ptr.vmem [resolvable:$true] %s274
          %280 = dma.hbm_to_vmem [thread:$0]  %s273, 8192, %s275, %s262, 4096, 2048, 128
        $region40: #{tpu_custom_call.1} parent=35 // pred_fallthru
          _
        // Predicated region
        $region41: #{tpu_custom_call.1} parent=35 // pred_check
          %p281 = pneg %p85
        $region42: #{tpu_custom_call.1} parent=35 // pred_check_branch
          %283 = sbr.rel (%p281) target = $region44
        $region43: #{tpu_custom_call.1} parent=35 // pred_region
          %s284 = sand.u32 %s75, 1
          %s285 = scalar_lea.sflag [#allocation7], %s284
          %s286 = sand.u32 %s75, 1
          %s287 = smul.addr %s286, 384
          %s288 = scalar_lea.vmem [#allocation6], %s287
          %s289 = smul.u32 16, %s31
          %s291 = ssub.s32 6144, 6144
          %292 = vsyncadd %s285, %s291
          %s293 = smul.addr %s30, 96
          %s294 = sadd.s32 %s289, %s293
          %s295 = smul.addr %s294, 128
          %s296 = scalar_lea.hbm %s1, %s295
          %s297 = sshll.u32 %s288, 4
          %s298 = int_to_ptr.vmem [resolvable:$true] %s297
          %303 = dma.hbm_to_vmem [thread:$0]  %s296, 6144, %s298, %s285, 4096, 2048, 128
        $region44: #{tpu_custom_call.1} parent=35 // pred_fallthru
          _
      $region36: #{tpu_custom_call.1} parent=5 // pred_fallthru
        _
      %p304 = scmp.le.s32.totalorder 1, %s23
      %p305 = scmp.lt.s32.totalorder %s23, 5
      %p306 = pnand %p304, %p305
      %p307 = pneg %p306
      // Predicated region
      $region45: #{tpu_custom_call.1} parent=5 // pred_check
        _
      $region46: #{tpu_custom_call.1} parent=5 // pred_check_branch
        %309 = sbr.rel (%p306) target = $region48
      $region47: #{tpu_custom_call.1} parent=5 // pred_region
        %s310 = ssub.s32 %s23, 1
        %s311 = sand.u32 %s50, 1
        %s312 = scalar_lea.sflag [#allocation4], %s311
        %s313 = sand.u32 %s50, 1
        %s314 = smul.addr %s313, 512
        %s315 = scalar_lea.vmem [#allocation3], %s314
        // Predicated region
        $region49: #{tpu_custom_call.1} parent=47 // pred_check
          %p316 = pneg %p63
        $region50: #{tpu_custom_call.1} parent=47 // pred_check_branch
          %318 = sbr.rel (%p316) target = $region52
        $region51: #{tpu_custom_call.1} parent=47 // pred_region
          %319 = dma.done %s312, 8192
        $region52: #{tpu_custom_call.1} parent=47 // pred_fallthru
          _
        %s320 = sand.u32 %s78, 1
        %s321 = scalar_lea.sflag [#allocation7], %s320
        %s322 = sand.u32 %s78, 1
        %s323 = smul.addr %s322, 384
        %s324 = scalar_lea.vmem [#allocation6], %s323
        // Predicated region
        $region53: #{tpu_custom_call.1} parent=47 // pred_check
          %p325 = pneg %p91
        $region54: #{tpu_custom_call.1} parent=47 // pred_check_branch
          %327 = sbr.rel (%p325) target = $region56
        $region55: #{tpu_custom_call.1} parent=47 // pred_region
          %328 = dma.done %s321, 6144
        $region56: #{tpu_custom_call.1} parent=47 // pred_fallthru
          _
        %s329 = sand.u32 %s50, 1
        %s330 = scalar_lea.sflag [#allocation4], %s329
        %s331 = sand.u32 %s50, 1
        %s332 = smul.addr %s331, 512
        %s333 = scalar_lea.vmem [#allocation3], %s332
        %p334 = pneg %p63
        %p335 = pneg %p60
        %s336 = sand.u32 %s78, 1
        %s337 = scalar_lea.sflag [#allocation7], %s336
        %s338 = sand.u32 %s78, 1
        %s339 = smul.addr %s338, 384
        %s340 = scalar_lea.vmem [#allocation6], %s339
        %p341 = pneg %p91
        %p342 = pneg %p88
        %p343 = pneg %p112
        %p344 = pneg %p109
        %p345 = pneg %p133
        %p346 = pneg %p130
        %p347 = pneg %p154
        %p348 = pneg %p151
        %p349 = pneg %p175
        %p350 = pneg %p172
        %p351 = pneg %p196
        %p352 = pneg %p193
        %p353 = pneg %p224
        %p354 = pneg %p221
        %s355 = sand.u32 %s211, 1
        %s356 = scalar_lea.sflag [#allocation5], %s355
        %s357 = sand.u32 %s211, 1
        %s358 = smul.addr %s357, 384
        %s359 = scalar_lea.vmem [#allocation8], %s358
        %s360 = smul.u32 16, %s33
        %s361 = smul.u32 16, %s33
        %s362 = smul.u32 16, %s33
        %v363 = vld [vmem:[%s315] sm:$0xff]
        %v364 = vld [vmem:[%s315 + $0x8] sm:$0xff]
        %v365 = vld [vmem:[%s315 + $0x10] sm:$0xff]
        %v366 = vld [vmem:[%s315 + $0x18] sm:$0xff]
        %v367 = vld [vmem:[%s315 + $0x20] sm:$0xff]
        %v368 = vld [vmem:[%s315 + $0x28] sm:$0xff]
        %v369 = vld [vmem:[%s315 + $0x30] sm:$0xff]
        %v370 = vld [vmem:[%s315 + $0x38] sm:$0xff]
        %v371 = vld [vmem:[%s315 + $0x40] sm:$0xff]
        %v372 = vld [vmem:[%s315 + $0x48] sm:$0xff]
        %v373 = vld [vmem:[%s315 + $0x50] sm:$0xff]
        %v374 = vld [vmem:[%s315 + $0x58] sm:$0xff]
        %v375 = vld [vmem:[%s315 + $0x60] sm:$0xff]
        %v376 = vld [vmem:[%s315 + $0x68] sm:$0xff]
        %v377 = vld [vmem:[%s315 + $0x70] sm:$0xff]
        %v378 = vld [vmem:[%s315 + $0x78] sm:$0xff]
        %v379 = vld [vmem:[%s315 + $0x80] sm:$0xff]
        %v380 = vld [vmem:[%s315 + $0x88] sm:$0xff]
        %v381 = vld [vmem:[%s315 + $0x90] sm:$0xff]
        %v382 = vld [vmem:[%s315 + $0x98] sm:$0xff]
        %v383 = vld [vmem:[%s315 + $0xa0] sm:$0xff]
        %v384 = vld [vmem:[%s315 + $0xa8] sm:$0xff]
        %v385 = vld [vmem:[%s315 + $0xb0] sm:$0xff]
        %v386 = vld [vmem:[%s315 + $0xb8] sm:$0xff]
        %v387 = vld [vmem:[%s315 + $0xc0] sm:$0xff]
        %v388 = vld [vmem:[%s315 + $0xc8] sm:$0xff]
        %v389 = vld [vmem:[%s315 + $0xd0] sm:$0xff]
        %v390 = vld [vmem:[%s315 + $0xd8] sm:$0xff]
        %v391 = vld [vmem:[%s315 + $0xe0] sm:$0xff]
        %v392 = vld [vmem:[%s315 + $0xe8] sm:$0xff]
        %v393 = vld [vmem:[%s315 + $0xf0] sm:$0xff]
        %v394 = vld [vmem:[%s315 + $0xf8] sm:$0xff]
        %v395 = vld [vmem:[%s315 + $0x100] sm:$0xff]
        %v396 = vld [vmem:[%s315 + $0x108] sm:$0xff]
        %v397 = vld [vmem:[%s315 + $0x110] sm:$0xff]
        %v398 = vld [vmem:[%s315 + $0x118] sm:$0xff]
        %v399 = vld [vmem:[%s315 + $0x120] sm:$0xff]
        %v400 = vld [vmem:[%s315 + $0x128] sm:$0xff]
        %v401 = vld [vmem:[%s315 + $0x130] sm:$0xff]
        %v402 = vld [vmem:[%s315 + $0x138] sm:$0xff]
        %v403 = vld [vmem:[%s315 + $0x140] sm:$0xff]
        %v404 = vld [vmem:[%s315 + $0x148] sm:$0xff]
        %v405 = vld [vmem:[%s315 + $0x150] sm:$0xff]
        %v406 = vld [vmem:[%s315 + $0x158] sm:$0xff]
        %v407 = vld [vmem:[%s315 + $0x160] sm:$0xff]
        %v408 = vld [vmem:[%s315 + $0x168] sm:$0xff]
        %v409 = vld [vmem:[%s315 + $0x170] sm:$0xff]
        %v410 = vld [vmem:[%s315 + $0x178] sm:$0xff]
        %v411 = vld [vmem:[%s315 + $0x180] sm:$0xff]
        %v412 = vld [vmem:[%s315 + $0x188] sm:$0xff]
        %v413 = vld [vmem:[%s315 + $0x190] sm:$0xff]
        %v414 = vld [vmem:[%s315 + $0x198] sm:$0xff]
        %v415 = vld [vmem:[%s315 + $0x1a0] sm:$0xff]
        %v416 = vld [vmem:[%s315 + $0x1a8] sm:$0xff]
        %v417 = vld [vmem:[%s315 + $0x1b0] sm:$0xff]
        %v418 = vld [vmem:[%s315 + $0x1b8] sm:$0xff]
        %v419 = vld [vmem:[%s315 + $0x1c0] sm:$0xff]
        %v420 = vld [vmem:[%s315 + $0x1c8] sm:$0xff]
        %v421 = vld [vmem:[%s315 + $0x1d0] sm:$0xff]
        %v422 = vld [vmem:[%s315 + $0x1d8] sm:$0xff]
        %v423 = vld [vmem:[%s315 + $0x1e0] sm:$0xff]
        %v424 = vld [vmem:[%s315 + $0x1e8] sm:$0xff]
        %v425 = vld [vmem:[%s315 + $0x1f0] sm:$0xff]
        %v426 = vld [vmem:[%s315 + $0x1f8] sm:$0xff]
        %v427 = vld [vmem:[%s324] sm:$0xff]
        %v428 = vld [vmem:[%s324 + $0x8] sm:$0xff]
        %v429 = vld [vmem:[%s324 + $0x10] sm:$0xff]
        %v430 = vld [vmem:[%s324 + $0x18] sm:$0xff]
        %v431 = vld [vmem:[%s324 + $0x20] sm:$0xff]
        %v432 = vld [vmem:[%s324 + $0x28] sm:$0xff]
        %v433 = vld [vmem:[%s324 + $0x30] sm:$0xff]
        %v434 = vld [vmem:[%s324 + $0x38] sm:$0xff]
        %v435 = vld [vmem:[%s324 + $0x40] sm:$0xff]
        %v436 = vld [vmem:[%s324 + $0x48] sm:$0xff]
        %v437 = vld [vmem:[%s324 + $0x50] sm:$0xff]
        %v438 = vld [vmem:[%s324 + $0x58] sm:$0xff]
        %v439 = vld [vmem:[%s324 + $0x60] sm:$0xff]
        %v440 = vld [vmem:[%s324 + $0x68] sm:$0xff]
        %v441 = vld [vmem:[%s324 + $0x70] sm:$0xff]
        %v442 = vld [vmem:[%s324 + $0x78] sm:$0xff]
        %v443 = vld [vmem:[%s324 + $0x80] sm:$0xff]
        %v444 = vld [vmem:[%s324 + $0x88] sm:$0xff]
        %v445 = vld [vmem:[%s324 + $0x90] sm:$0xff]
        %v446 = vld [vmem:[%s324 + $0x98] sm:$0xff]
        %v447 = vld [vmem:[%s324 + $0xa0] sm:$0xff]
        %v448 = vld [vmem:[%s324 + $0xa8] sm:$0xff]
        %v449 = vld [vmem:[%s324 + $0xb0] sm:$0xff]
        %v450 = vld [vmem:[%s324 + $0xb8] sm:$0xff]
        %v451 = vld [vmem:[%s324 + $0xc0] sm:$0xff]
        %v452 = vld [vmem:[%s324 + $0xc8] sm:$0xff]
        %v453 = vld [vmem:[%s324 + $0xd0] sm:$0xff]
        %v454 = vld [vmem:[%s324 + $0xd8] sm:$0xff]
        %v455 = vld [vmem:[%s324 + $0xe0] sm:$0xff]
        %v456 = vld [vmem:[%s324 + $0xe8] sm:$0xff]
        %v457 = vld [vmem:[%s324 + $0xf0] sm:$0xff]
        %v458 = vld [vmem:[%s324 + $0xf8] sm:$0xff]
        %v459 = vld [vmem:[%s324 + $0x100] sm:$0xff]
        %v460 = vld [vmem:[%s324 + $0x108] sm:$0xff]
        %v461 = vld [vmem:[%s324 + $0x110] sm:$0xff]
        %v462 = vld [vmem:[%s324 + $0x118] sm:$0xff]
        %v463 = vld [vmem:[%s324 + $0x120] sm:$0xff]
        %v464 = vld [vmem:[%s324 + $0x128] sm:$0xff]
        %v465 = vld [vmem:[%s324 + $0x130] sm:$0xff]
        %v466 = vld [vmem:[%s324 + $0x138] sm:$0xff]
        %v467 = vld [vmem:[%s324 + $0x140] sm:$0xff]
        %v468 = vld [vmem:[%s324 + $0x148] sm:$0xff]
        %v469 = vld [vmem:[%s324 + $0x150] sm:$0xff]
        %v470 = vld [vmem:[%s324 + $0x158] sm:$0xff]
        %v471 = vld [vmem:[%s324 + $0x160] sm:$0xff]
        %v472 = vld [vmem:[%s324 + $0x168] sm:$0xff]
        %v473 = vld [vmem:[%s324 + $0x170] sm:$0xff]
        %v474 = vld [vmem:[%s324 + $0x178] sm:$0xff]
        %v475 = vld [vmem:[%s2] sm:$0xff]
        %v476 = vld [vmem:[%s2 + $0x8] sm:$0xff]
        %v477 = vld [vmem:[%s3] sm:$0xff]
        %v478 = vld [vmem:[%s3 + $0x8] sm:$0xff]
        %vm479 = vcmask 195584
        %v481 = vsel %vm479, %v477, 0
        %v484 = vsel %vm479, %v478, 0
        %486 = vmatprep.subr.mxu0 %v428
        %487 = vmatpush1.msra.mxu0 %v427
        %488 = vmatprep.subr.mxu0 %v444
        %489 = vmatpush1.msra.mxu0 %v443
        %490 = vmatprep.subr.mxu0 %v460
        %491 = vmatpush1.msra.mxu0 %v459
        %492 = vmatprep.subr.mxu0 0.0
        %493 = vmatpush1.msra.mxu0 0.0
        %494 = vmatprep.subr.mxu0 0.0
        %495 = vmatpush1.msra.mxu0 0.0
        %496 = vmatprep.subr.mxu0 0.0
        %497 = vmatpush1.msra.mxu0 0.0
        %498 = vmatprep.subr.mxu0 0.0
        %499 = vmatpush1.msra.mxu0 0.0
        %500 = vmatprep.subr.mxu0 0.0
        %501 = vmatpush1.msra.mxu0 0.0
        %502 = vmatprep.subr.mxu0 0.0
        %503 = vmatpush1.msra.mxu0 0.0
        %504 = vmatprep.subr.mxu0 0.0
        %505 = vmatpush1.msra.mxu0 0.0
        %506 = vmatprep.subr.mxu0 0.0
        %507 = vmatpush1.msra.mxu0 0.0
        %508 = vmatprep.subr.mxu0 0.0
        %509 = vmatpush1.msra.mxu0 0.0
        %510 = vmatprep.subr.mxu0 0.0
        %511 = vmatpush1.msra.mxu0 0.0
        %512 = vmatprep.subr.mxu0 0.0
        %513 = vmatpush1.msra.mxu0 0.0
        %514 = vmatprep.subr.mxu0 0.0
        %515 = vmatpush1.msra.mxu0 0.0
        %516 = vmatprep.subr.mxu0 0.0
        %517 = vmatpush1.msra.mxu0 0.0
        %518 = vmatprep.subr.mxu0 0.0
        %519 = vmatpush1.msra.mxu0 0.0
        %520 = vmatprep.subr.mxu0 0.0
        %521 = vmatpush1.msra.mxu0 0.0
        %522 = vmatprep.subr.mxu0 0.0
        %523 = vmatpush1.msra.mxu0 0.0
        %524 = vmatprep.subr.mxu0 0.0
        %525 = vmatpush1.msra.mxu0 0.0
        %526 = vmatprep.subr.mxu0 0.0
        %527 = vmatpush1.msra.mxu0 0.0
        %528 = vmatprep.subr.mxu0 0.0
        %529 = vmatpush1.msra.mxu0 0.0
        %530 = vmatprep.subr.mxu0 0.0
        %531 = vmatpush1.msra.mxu0 0.0
        %532 = vmatprep.subr.mxu0 0.0
        %533 = vmatpush1.msra.mxu0 0.0
        %534 = vmatprep.subr.mxu0 0.0
        %535 = vmatpush1.msra.mxu0 0.0
        %536 = vmatprep.subr.mxu0 0.0
        %537 = vmatpush1.msra.mxu0 0.0
        %538 = vmatprep.subr.mxu0 0.0
        %539 = vmatpush1.msra.mxu0 0.0
        %540 = vmatprep.subr.mxu0 0.0
        %541 = vmatpush1.msra.mxu0 0.0
        %542 = vmatprep.subr.mxu0 0.0
        %543 = vmatpush1.msra.mxu0 0.0
        %544 = vmatprep.subr.mxu0 0.0
        %545 = vmatpush1.msra.mxu0 0.0
        %546 = vmatprep.subr.mxu0 0.0
        %547 = vmatpush1.msra.mxu0 0.0
        %548 = vmatprep.subr.mxu0 0.0
        %549 = vmatpush1.msra.mxu0 0.0
        %550 = vmatprep.mubr.f32.mxu0 0.0
        %551 = vmatmul.mubr.f32.gmra.mrb[0].mxu0 %v481
        %v552 = vpop.f32.mrb[0].mxu0
        %v553 = vadd.f32 0.0, %v552
        %v554 = vpop.f32.mrb[0].mxu0
        %v555 = vadd.f32 0.0, %v554
        %556 = vmatprep.mubr.f32.mxu0 0.0
        %557 = vmatmul.mubr.f32.gmra.mrb[0].mxu0 %v484
        %v558 = vpop.f32.mrb[0].mxu0
        %v559 = vadd.f32 0.0, %v558
        %v560 = vpop.f32.mrb[0].mxu0
        %v561 = vadd.f32 0.0, %v560
        %562 = vdwg.mxu0
        %563 = vmatprep.subr.mxu0 %v430
        %564 = vmatpush1.msra.mxu0 %v429
        %565 = vmatprep.subr.mxu0 %v446
        %566 = vmatpush1.msra.mxu0 %v445
        %567 = vmatprep.subr.mxu0 %v462
        %568 = vmatpush1.msra.mxu0 %v461
        %569 = vmatprep.subr.mxu0 0.0
        %570 = vmatpush1.msra.mxu0 0.0
        %571 = vmatprep.subr.mxu0 0.0
        %572 = vmatpush1.msra.mxu0 0.0
        %573 = vmatprep.subr.mxu0 0.0
        %574 = vmatpush1.msra.mxu0 0.0
        %575 = vmatprep.subr.mxu0 0.0
        %576 = vmatpush1.msra.mxu0 0.0
        %577 = vmatprep.subr.mxu0 0.0
        %578 = vmatpush1.msra.mxu0 0.0
        %579 = vmatprep.subr.mxu0 0.0
        %580 = vmatpush1.msra.mxu0 0.0
        %581 = vmatprep.subr.mxu0 0.0
        %582 = vmatpush1.msra.mxu0 0.0
        %583 = vmatprep.subr.mxu0 0.0
        %584 = vmatpush1.msra.mxu0 0.0
        %585 = vmatprep.subr.mxu0 0.0
        %586 = vmatpush1.msra.mxu0 0.0
        %587 = vmatprep.subr.mxu0 0.0
        %588 = vmatpush1.msra.mxu0 0.0
        %589 = vmatprep.subr.mxu0 0.0
        %590 = vmatpush1.msra.mxu0 0.0
        %591 = vmatprep.subr.mxu0 0.0
        %592 = vmatpush1.msra.mxu0 0.0
        %593 = vmatprep.subr.mxu0 0.0
        %594 = vmatpush1.msra.mxu0 0.0
        %595 = vmatprep.subr.mxu0 0.0
        %596 = vmatpush1.msra.mxu0 0.0
        %597 = vmatprep.subr.mxu0 0.0
        %598 = vmatpush1.msra.mxu0 0.0
        %599 = vmatprep.subr.mxu0 0.0
        %600 = vmatpush1.msra.mxu0 0.0
        %601 = vmatprep.subr.mxu0 0.0
        %602 = vmatpush1.msra.mxu0 0.0
        %603 = vmatprep.subr.mxu0 0.0
        %604 = vmatpush1.msra.mxu0 0.0
        %605 = vmatprep.subr.mxu0 0.0
        %606 = vmatpush1.msra.mxu0 0.0
        %607 = vmatprep.subr.mxu0 0.0
        %608 = vmatpush1.msra.mxu0 0.0
        %609 = vmatprep.subr.mxu0 0.0
        %610 = vmatpush1.msra.mxu0 0.0
        %611 = vmatprep.subr.mxu0 0.0
        %612 = vmatpush1.msra.mxu0 0.0
        %613 = vmatprep.subr.mxu0 0.0
        %614 = vmatpush1.msra.mxu0 0.0
        %615 = vmatprep.subr.mxu0 0.0
        %616 = vmatpush1.msra.mxu0 0.0
        %617 = vmatprep.subr.mxu0 0.0
        %618 = vmatpush1.msra.mxu0 0.0
        %619 = vmatprep.subr.mxu0 0.0
        %620 = vmatpush1.msra.mxu0 0.0
        %621 = vmatprep.subr.mxu0 0.0
        %622 = vmatpush1.msra.mxu0 0.0
        %623 = vmatprep.subr.mxu0 0.0
        %624 = vmatpush1.msra.mxu0 0.0
        %625 = vmatprep.subr.mxu0 0.0
        %626 = vmatpush1.msra.mxu0 0.0
        %627 = vmatprep.mubr.f32.mxu0 0.0
        %628 = vmatmul.mubr.f32.gmra.mrb[0].mxu0 %v481
        %v629 = vpop.f32.mrb[0].mxu0
        %v630 = vadd.f32 0.0, %v629
        %v631 = vpop.f32.mrb[0].mxu0
        %v632 = vadd.f32 0.0, %v631
        %633 = vmatprep.mubr.f32.mxu0 0.0
        %634 = vmatmul.mubr.f32.gmra.mrb[0].mxu0 %v484
        %v635 = vpop.f32.mrb[0].mxu0
        %v636 = vadd.f32 0.0, %v635
        %v637 = vpop.f32.mrb[0].mxu0
        %v638 = vadd.f32 0.0, %v637
        %639 = vdwg.mxu0
        %640 = vmatprep.subr.mxu0 %v432
        %641 = vmatpush1.msra.mxu0 %v431
        %642 = vmatprep.subr.mxu0 %v448
        %643 = vmatpush1.msra.mxu0 %v447
        %644 = vmatprep.subr.mxu0 %v464
        %645 = vmatpush1.msra.mxu0 %v463
        %646 = vmatprep.subr.mxu0 0.0
        %647 = vmatpush1.msra.mxu0 0.0
        %648 = vmatprep.subr.mxu0 0.0
        %649 = vmatpush1.msra.mxu0 0.0
        %650 = vmatprep.subr.mxu0 0.0
        %651 = vmatpush1.msra.mxu0 0.0
        %652 = vmatprep.subr.mxu0 0.0
        %653 = vmatpush1.msra.mxu0 0.0
        %654 = vmatprep.subr.mxu0 0.0
        %655 = vmatpush1.msra.mxu0 0.0
        %656 = vmatprep.subr.mxu0 0.0
        %657 = vmatpush1.msra.mxu0 0.0
        %658 = vmatprep.subr.mxu0 0.0
        %659 = vmatpush1.msra.mxu0 0.0
        %660 = vmatprep.subr.mxu0 0.0
        %661 = vmatpush1.msra.mxu0 0.0
        %662 = vmatprep.subr.mxu0 0.0
        %663 = vmatpush1.msra.mxu0 0.0
        %664 = vmatprep.subr.mxu0 0.0
        %665 = vmatpush1.msra.mxu0 0.0
        %666 = vmatprep.subr.mxu0 0.0
        %667 = vmatpush1.msra.mxu0 0.0
        %668 = vmatprep.subr.mxu0 0.0
        %669 = vmatpush1.msra.mxu0 0.0
        %670 = vmatprep.subr.mxu0 0.0
        %671 = vmatpush1.msra.mxu0 0.0
        %672 = vmatprep.subr.mxu0 0.0
        %673 = vmatpush1.msra.mxu0 0.0
        %674 = vmatprep.subr.mxu0 0.0
        %675 = vmatpush1.msra.mxu0 0.0
        %676 = vmatprep.subr.mxu0 0.0
        %677 = vmatpush1.msra.mxu0 0.0
        %678 = vmatprep.subr.mxu0 0.0
        %679 = vmatpush1.msra.mxu0 0.0
        %680 = vmatprep.subr.mxu0 0.0
        %681 = vmatpush1.msra.mxu0 0.0
        %682 = vmatprep.subr.mxu0 0.0
        %683 = vmatpush1.msra.mxu0 0.0
        %684 = vmatprep.subr.mxu0 0.0
        %685 = vmatpush1.msra.mxu0 0.0
        %686 = vmatprep.subr.mxu0 0.0
        %687 = vmatpush1.msra.mxu0 0.0
        %688 = vmatprep.subr.mxu0 0.0
        %689 = vmatpush1.msra.mxu0 0.0
        %690 = vmatprep.subr.mxu0 0.0
        %691 = vmatpush1.msra.mxu0 0.0
        %692 = vmatprep.subr.mxu0 0.0
        %693 = vmatpush1.msra.mxu0 0.0
        %694 = vmatprep.subr.mxu0 0.0
        %695 = vmatpush1.msra.mxu0 0.0
        %696 = vmatprep.subr.mxu0 0.0
        %697 = vmatpush1.msra.mxu0 0.0
        %698 = vmatprep.subr.mxu0 0.0
        %699 = vmatpush1.msra.mxu0 0.0
        %700 = vmatprep.subr.mxu0 0.0
        %701 = vmatpush1.msra.mxu0 0.0
        %702 = vmatprep.subr.mxu0 0.0
        %703 = vmatpush1.msra.mxu0 0.0
        %704 = vmatprep.mubr.f32.mxu0 0.0
        %705 = vmatmul.mubr.f32.gmra.mrb[0].mxu0 %v481
        %v706 = vpop.f32.mrb[0].mxu0
        %v707 = vadd.f32 0.0, %v706
        %v708 = vpop.f32.mrb[0].mxu0
        %v709 = vadd.f32 0.0, %v708
        %710 = vmatprep.mubr.f32.mxu0 0.0
        %711 = vmatmul.mubr.f32.gmra.mrb[0].mxu0 %v484
        %v712 = vpop.f32.mrb[0].mxu0
        %v713 = vadd.f32 0.0, %v712
        %v714 = vpop.f32.mrb[0].mxu0
        %v715 = vadd.f32 0.0, %v714
        %716 = vdwg.mxu0
        %717 = vmatprep.subr.mxu0 %v434
        %718 = vmatpush1.msra.mxu0 %v433
        %719 = vmatprep.subr.mxu0 %v450
        %720 = vmatpush1.msra.mxu0 %v449
        %721 = vmatprep.subr.mxu0 %v466
        %722 = vmatpush1.msra.mxu0 %v465
        %723 = vmatprep.subr.mxu0 0.0
        %724 = vmatpush1.msra.mxu0 0.0
        %725 = vmatprep.subr.mxu0 0.0
        %726 = vmatpush1.msra.mxu0 0.0
        %727 = vmatprep.subr.mxu0 0.0
        %728 = vmatpush1.msra.mxu0 0.0
        %729 = vmatprep.subr.mxu0 0.0
        %730 = vmatpush1.msra.mxu0 0.0
        %731 = vmatprep.subr.mxu0 0.0
        %732 = vmatpush1.msra.mxu0 0.0
        %733 = vmatprep.subr.mxu0 0.0
        %734 = vmatpush1.msra.mxu0 0.0
        %735 = vmatprep.subr.mxu0 0.0
        %736 = vmatpush1.msra.mxu0 0.0
        %737 = vmatprep.subr.mxu0 0.0
        %738 = vmatpush1.msra.mxu0 0.0
        %739 = vmatprep.subr.mxu0 0.0
        %740 = vmatpush1.msra.mxu0 0.0
        %741 = vmatprep.subr.mxu0 0.0
        %742 = vmatpush1.msra.mxu0 0.0
        %743 = vmatprep.subr.mxu0 0.0
        %744 = vmatpush1.msra.mxu0 0.0
        %745 = vmatprep.subr.mxu0 0.0
        %746 = vmatpush1.msra.mxu0 0.0
        %747 = vmatprep.subr.mxu0 0.0
        %748 = vmatpush1.msra.mxu0 0.0
        %749 = vmatprep.subr.mxu0 0.0
        %750 = vmatpush1.msra.mxu0 0.0
        %751 = vmatprep.subr.mxu0 0.0
        %752 = vmatpush1.msra.mxu0 0.0
        %753 = vmatprep.subr.mxu0 0.0
        %754 = vmatpush1.msra.mxu0 0.0
        %755 = vmatprep.subr.mxu0 0.0
        %756 = vmatpush1.msra.mxu0 0.0
        %757 = vmatprep.subr.mxu0 0.0
        %758 = vmatpush1.msra.mxu0 0.0
        %759 = vmatprep.subr.mxu0 0.0
        %760 = vmatpush1.msra.mxu0 0.0
        %761 = vmatprep.subr.mxu0 0.0
        %762 = vmatpush1.msra.mxu0 0.0
        %763 = vmatprep.subr.mxu0 0.0
        %764 = vmatpush1.msra.mxu0 0.0
        %765 = vmatprep.subr.mxu0 0.0
        %766 = vmatpush1.msra.mxu0 0.0
        %767 = vmatprep.subr.mxu0 0.0
        %768 = vmatpush1.msra.mxu0 0.0
        %769 = vmatprep.subr.mxu0 0.0
        %770 = vmatpush1.msra.mxu0 0.0
        %771 = vmatprep.subr.mxu0 0.0
        %772 = vmatpush1.msra.mxu0 0.0
        %773 = vmatprep.subr.mxu0 0.0
        %774 = vmatpush1.msra.mxu0 0.0
        %775 = vmatprep.subr.mxu0 0.0
        %776 = vmatpush1.msra.mxu0 0.0
        %777 = vmatprep.subr.mxu0 0.0
        %778 = vmatpush1.msra.mxu0 0.0
        %779 = vmatprep.subr.mxu0 0.0
        %780 = vmatpush1.msra.mxu0 0.0
        %781 = vmatprep.mubr.f32.mxu0 0.0
        %782 = vmatmul.mubr.f32.gmra.mrb[0].mxu0 %v481
        %v783 = vpop.f32.mrb[0].mxu0
        %v784 = vadd.f32 0.0, %v783
        %v785 = vpop.f32.mrb[0].mxu0
        %v786 = vadd.f32 0.0, %v785
        %787 = vmatprep.mubr.f32.mxu0 0.0
        %788 = vmatmul.mubr.f32.gmra.mrb[0].mxu0 %v484
        %v789 = vpop.f32.mrb[0].mxu0
        %v790 = vadd.f32 0.0, %v789
        %v791 = vpop.f32.mrb[0].mxu0
        %v792 = vadd.f32 0.0, %v791
        %793 = vdwg.mxu0
        %794 = vmatprep.subr.mxu0 %v436
        %795 = vmatpush1.msra.mxu0 %v435
        %796 = vmatprep.subr.mxu0 %v452
        %797 = vmatpush1.msra.mxu0 %v451
        %798 = vmatprep.subr.mxu0 %v468
        %799 = vmatpush1.msra.mxu0 %v467
        %800 = vmatprep.subr.mxu0 0.0
        %801 = vmatpush1.msra.mxu0 0.0
        %802 = vmatprep.subr.mxu0 0.0
        %803 = vmatpush1.msra.mxu0 0.0
        %804 = vmatprep.subr.mxu0 0.0
        %805 = vmatpush1.msra.mxu0 0.0
        %806 = vmatprep.subr.mxu0 0.0
        %807 = vmatpush1.msra.mxu0 0.0
        %808 = vmatprep.subr.mxu0 0.0
        %809 = vmatpush1.msra.mxu0 0.0
        %810 = vmatprep.subr.mxu0 0.0
        %811 = vmatpush1.msra.mxu0 0.0
        %812 = vmatprep.subr.mxu0 0.0
        %813 = vmatpush1.msra.mxu0 0.0
        %814 = vmatprep.subr.mxu0 0.0
        %815 = vmatpush1.msra.mxu0 0.0
        %816 = vmatprep.subr.mxu0 0.0
        %817 = vmatpush1.msra.mxu0 0.0
        %818 = vmatprep.subr.mxu0 0.0
        %819 = vmatpush1.msra.mxu0 0.0
        %820 = vmatprep.subr.mxu0 0.0
        %821 = vmatpush1.msra.mxu0 0.0
        %822 = vmatprep.subr.mxu0 0.0
        %823 = vmatpush1.msra.mxu0 0.0
        %824 = vmatprep.subr.mxu0 0.0
        %825 = vmatpush1.msra.mxu0 0.0
        %826 = vmatprep.subr.mxu0 0.0
        %827 = vmatpush1.msra.mxu0 0.0
        %828 = vmatprep.subr.mxu0 0.0
        %829 = vmatpush1.msra.mxu0 0.0
        %830 = vmatprep.subr.mxu0 0.0
        %831 = vmatpush1.msra.mxu0 0.0
        %832 = vmatprep.subr.mxu0 0.0
        %833 = vmatpush1.msra.mxu0 0.0
        %834 = vmatprep.subr.mxu0 0.0
        %835 = vmatpush1.msra.mxu0 0.0
        %836 = vmatprep.subr.mxu0 0.0
        %837 = vmatpush1.msra.mxu0 0.0
        %838 = vmatprep.subr.mxu0 0.0
        %839 = vmatpush1.msra.mxu0 0.0
        %840 = vmatprep.subr.mxu0 0.0
        %841 = vmatpush1.msra.mxu0 0.0
        %842 = vmatprep.subr.mxu0 0.0
        %843 = vmatpush1.msra.mxu0 0.0
        %844 = vmatprep.subr.mxu0 0.0
        %845 = vmatpush1.msra.mxu0 0.0
        %846 = vmatprep.subr.mxu0 0.0
        %847 = vmatpush1.msra.mxu0 0.0
        %848 = vmatprep.subr.mxu0 0.0
        %849 = vmatpush1.msra.mxu0 0.0
        %850 = vmatprep.subr.mxu0 0.0
        %851 = vmatpush1.msra.mxu0 0.0
        %852 = vmatprep.subr.mxu0 0.0
        %853 = vmatpush1.msra.mxu0 0.0
        %854 = vmatprep.subr.mxu0 0.0
        %855 = vmatpush1.msra.mxu0 0.0
        %856 = vmatprep.subr.mxu0 0.0
        %857 = vmatpush1.msra.mxu0 0.0
        %858 = vmatprep.mubr.f32.mxu0 0.0
        %859 = vmatmul.mubr.f32.gmra.mrb[0].mxu0 %v481
        %v860 = vpop.f32.mrb[0].mxu0
        %v861 = vadd.f32 0.0, %v860
        %v862 = vpop.f32.mrb[0].mxu0
        %v863 = vadd.f32 0.0, %v862
        %864 = vmatprep.mubr.f32.mxu0 0.0
        %865 = vmatmul.mubr.f32.gmra.mrb[0].mxu0 %v484
        %v866 = vpop.f32.mrb[0].mxu0
        %v867 = vadd.f32 0.0, %v866
        %v868 = vpop.f32.mrb[0].mxu0
        %v869 = vadd.f32 0.0, %v868
        %870 = vdwg.mxu0
        %871 = vmatprep.subr.mxu0 %v438
        %872 = vmatpush1.msra.mxu0 %v437
        %873 = vmatprep.subr.mxu0 %v454
        %874 = vmatpush1.msra.mxu0 %v453
        %875 = vmatprep.subr.mxu0 %v470
        %876 = vmatpush1.msra.mxu0 %v469
        %877 = vmatprep.subr.mxu0 0.0
        %878 = vmatpush1.msra.mxu0 0.0
        %879 = vmatprep.subr.mxu0 0.0
        %880 = vmatpush1.msra.mxu0 0.0
        %881 = vmatprep.subr.mxu0 0.0
        %882 = vmatpush1.msra.mxu0 0.0
        %883 = vmatprep.subr.mxu0 0.0
        %884 = vmatpush1.msra.mxu0 0.0
        %885 = vmatprep.subr.mxu0 0.0
        %886 = vmatpush1.msra.mxu0 0.0
        %887 = vmatprep.subr.mxu0 0.0
        %888 = vmatpush1.msra.mxu0 0.0
        %889 = vmatprep.subr.mxu0 0.0
        %890 = vmatpush1.msra.mxu0 0.0
        %891 = vmatprep.subr.mxu0 0.0
        %892 = vmatpush1.msra.mxu0 0.0
        %893 = vmatprep.subr.mxu0 0.0
        %894 = vmatpush1.msra.mxu0 0.0
        %895 = vmatprep.subr.mxu0 0.0
        %896 = vmatpush1.msra.mxu0 0.0
        %897 = vmatprep.subr.mxu0 0.0
        %898 = vmatpush1.msra.mxu0 0.0
        %899 = vmatprep.subr.mxu0 0.0
        %900 = vmatpush1.msra.mxu0 0.0
        %901 = vmatprep.subr.mxu0 0.0
        %902 = vmatpush1.msra.mxu0 0.0
        %903 = vmatprep.subr.mxu0 0.0
        %904 = vmatpush1.msra.mxu0 0.0
        %905 = vmatprep.subr.mxu0 0.0
        %906 = vmatpush1.msra.mxu0 0.0
        %907 = vmatprep.subr.mxu0 0.0
        %908 = vmatpush1.msra.mxu0 0.0
        %909 = vmatprep.subr.mxu0 0.0
        %910 = vmatpush1.msra.mxu0 0.0
        %911 = vmatprep.subr.mxu0 0.0
        %912 = vmatpush1.msra.mxu0 0.0
        %913 = vmatprep.subr.mxu0 0.0
        %914 = vmatpush1.msra.mxu0 0.0
        %915 = vmatprep.subr.mxu0 0.0
        %916 = vmatpush1.msra.mxu0 0.0
        %917 = vmatprep.subr.mxu0 0.0
        %918 = vmatpush1.msra.mxu0 0.0
        %919 = vmatprep.subr.mxu0 0.0
        %920 = vmatpush1.msra.mxu0 0.0
        %921 = vmatprep.subr.mxu0 0.0
        %922 = vmatpush1.msra.mxu0 0.0
        %923 = vmatprep.subr.mxu0 0.0
        %924 = vmatpush1.msra.mxu0 0.0
        %925 = vmatprep.subr.mxu0 0.0
        %926 = vmatpush1.msra.mxu0 0.0
        %927 = vmatprep.subr.mxu0 0.0
        %928 = vmatpush1.msra.mxu0 0.0
        %929 = vmatprep.subr.mxu0 0.0
        %930 = vmatpush1.msra.mxu0 0.0
        %931 = vmatprep.subr.mxu0 0.0
        %932 = vmatpush1.msra.mxu0 0.0
        %933 = vmatprep.subr.mxu0 0.0
        %934 = vmatpush1.msra.mxu0 0.0
        %935 = vmatprep.mubr.f32.mxu0 0.0
        %936 = vmatmul.mubr.f32.gmra.mrb[0].mxu0 %v481
        %v937 = vpop.f32.mrb[0].mxu0
        %v938 = vadd.f32 0.0, %v937
        %v939 = vpop.f32.mrb[0].mxu0
        %v940 = vadd.f32 0.0, %v939
        %941 = vmatprep.mubr.f32.mxu0 0.0
        %942 = vmatmul.mubr.f32.gmra.mrb[0].mxu0 %v484
        %v943 = vpop.f32.mrb[0].mxu0
        %v944 = vadd.f32 0.0, %v943
        %v945 = vpop.f32.mrb[0].mxu0
        %v946 = vadd.f32 0.0, %v945
        %947 = vdwg.mxu0
        %948 = vmatprep.subr.mxu0 %v440
        %949 = vmatpush1.msra.mxu0 %v439
        %950 = vmatprep.subr.mxu0 %v456
        %951 = vmatpush1.msra.mxu0 %v455
        %952 = vmatprep.subr.mxu0 %v472
        %953 = vmatpush1.msra.mxu0 %v471
        %954 = vmatprep.subr.mxu0 0.0
        %955 = vmatpush1.msra.mxu0 0.0
        %956 = vmatprep.subr.mxu0 0.0
        %957 = vmatpush1.msra.mxu0 0.0
        %958 = vmatprep.subr.mxu0 0.0
        %959 = vmatpush1.msra.mxu0 0.0
        %960 = vmatprep.subr.mxu0 0.0
        %961 = vmatpush1.msra.mxu0 0.0
        %962 = vmatprep.subr.mxu0 0.0
        %963 = vmatpush1.msra.mxu0 0.0
        %964 = vmatprep.subr.mxu0 0.0
        %965 = vmatpush1.msra.mxu0 0.0
        %966 = vmatprep.subr.mxu0 0.0
        %967 = vmatpush1.msra.mxu0 0.0
        %968 = vmatprep.subr.mxu0 0.0
        %969 = vmatpush1.msra.mxu0 0.0
        %970 = vmatprep.subr.mxu0 0.0
        %971 = vmatpush1.msra.mxu0 0.0
        %972 = vmatprep.subr.mxu0 0.0
        %973 = vmatpush1.msra.mxu0 0.0
        %974 = vmatprep.subr.mxu0 0.0
        %975 = vmatpush1.msra.mxu0 0.0
        %976 = vmatprep.subr.mxu0 0.0
        %977 = vmatpush1.msra.mxu0 0.0
        %978 = vmatprep.subr.mxu0 0.0
        %979 = vmatpush1.msra.mxu0 0.0
        %980 = vmatprep.subr.mxu0 0.0
        %981 = vmatpush1.msra.mxu0 0.0
        %982 = vmatprep.subr.mxu0 0.0
        %983 = vmatpush1.msra.mxu0 0.0
        %984 = vmatprep.subr.mxu0 0.0
        %985 = vmatpush1.msra.mxu0 0.0
        %986 = vmatprep.subr.mxu0 0.0
        %987 = vmatpush1.msra.mxu0 0.0
        %988 = vmatprep.subr.mxu0 0.0
        %989 = vmatpush1.msra.mxu0 0.0
        %990 = vmatprep.subr.mxu0 0.0
        %991 = vmatpush1.msra.mxu0 0.0
        %992 = vmatprep.subr.mxu0 0.0
        %993 = vmatpush1.msra.mxu0 0.0
        %994 = vmatprep.subr.mxu0 0.0
        %995 = vmatpush1.msra.mxu0 0.0
        %996 = vmatprep.subr.mxu0 0.0
        %997 = vmatpush1.msra.mxu0 0.0
        %998 = vmatprep.subr.mxu0 0.0
        %999 = vmatpush1.msra.mxu0 0.0
        %1000 = vmatprep.subr.mxu0 0.0
        %1001 = vmatpush1.msra.mxu0 0.0
        %1002 = vmatprep.subr.mxu0 0.0
        %1003 = vmatpush1.msra.mxu0 0.0
        %1004 = vmatprep.subr.mxu0 0.0
        %1005 = vmatpush1.msra.mxu0 0.0
        %1006 = vmatprep.subr.mxu0 0.0
        %1007 = vmatpush1.msra.mxu0 0.0
        %1008 = vmatprep.subr.mxu0 0.0
        %1009 = vmatpush1.msra.mxu0 0.0
        %1010 = vmatprep.subr.mxu0 0.0
        %1011 = vmatpush1.msra.mxu0 0.0
        %1012 = vmatprep.mubr.f32.mxu0 0.0
        %1013 = vmatmul.mubr.f32.gmra.mrb[0].mxu0 %v481
        %v1014 = vpop.f32.mrb[0].mxu0
        %v1015 = vadd.f32 0.0, %v1014
        %v1016 = vpop.f32.mrb[0].mxu0
        %v1017 = vadd.f32 0.0, %v1016
        %1018 = vmatprep.mubr.f32.mxu0 0.0
        %1019 = vmatmul.mubr.f32.gmra.mrb[0].mxu0 %v484
        %v1020 = vpop.f32.mrb[0].mxu0
        %v1021 = vadd.f32 0.0, %v1020
        %v1022 = vpop.f32.mrb[0].mxu0
        %v1023 = vadd.f32 0.0, %v1022
        %1024 = vdwg.mxu0
        %1025 = vmatprep.subr.mxu0 %v442
        %1026 = vmatpush1.msra.mxu0 %v441
        %1027 = vmatprep.subr.mxu0 %v458
        %1028 = vmatpush1.msra.mxu0 %v457
        %1029 = vmatprep.subr.mxu0 %v474
        %1030 = vmatpush1.msra.mxu0 %v473
        %1031 = vmatprep.subr.mxu0 0.0
        %1032 = vmatpush1.msra.mxu0 0.0
        %1033 = vmatprep.subr.mxu0 0.0
        %1034 = vmatpush1.msra.mxu0 0.0
        %1035 = vmatprep.subr.mxu0 0.0
        %1036 = vmatpush1.msra.mxu0 0.0
        %1037 = vmatprep.subr.mxu0 0.0
        %1038 = vmatpush1.msra.mxu0 0.0
        %1039 = vmatprep.subr.mxu0 0.0
        %1040 = vmatpush1.msra.mxu0 0.0
        %1041 = vmatprep.subr.mxu0 0.0
        %1042 = vmatpush1.msra.mxu0 0.0
        %1043 = vmatprep.subr.mxu0 0.0
        %1044 = vmatpush1.msra.mxu0 0.0
        %1045 = vmatprep.subr.mxu0 0.0
        %1046 = vmatpush1.msra.mxu0 0.0
        %1047 = vmatprep.subr.mxu0 0.0
        %1048 = vmatpush1.msra.mxu0 0.0
        %1049 = vmatprep.subr.mxu0 0.0
        %1050 = vmatpush1.msra.mxu0 0.0
        %1051 = vmatprep.subr.mxu0 0.0
        %1052 = vmatpush1.msra.mxu0 0.0
        %1053 = vmatprep.subr.mxu0 0.0
        %1054 = vmatpush1.msra.mxu0 0.0
        %1055 = vmatprep.subr.mxu0 0.0
        %1056 = vmatpush1.msra.mxu0 0.0
        %1057 = vmatprep.subr.mxu0 0.0
        %1058 = vmatpush1.msra.mxu0 0.0
        %1059 = vmatprep.subr.mxu0 0.0
        %1060 = vmatpush1.msra.mxu0 0.0
        %1061 = vmatprep.subr.mxu0 0.0
        %1062 = vmatpush1.msra.mxu0 0.0
        %1063 = vmatprep.subr.mxu0 0.0
        %1064 = vmatpush1.msra.mxu0 0.0
        %1065 = vmatprep.subr.mxu0 0.0
        %1066 = vmatpush1.msra.mxu0 0.0
        %1067 = vmatprep.subr.mxu0 0.0
        %1068 = vmatpush1.msra.mxu0 0.0
        %1069 = vmatprep.subr.mxu0 0.0
        %1070 = vmatpush1.msra.mxu0 0.0
        %1071 = vmatprep.subr.mxu0 0.0
        %1072 = vmatpush1.msra.mxu0 0.0
        %1073 = vmatprep.subr.mxu0 0.0
        %1074 = vmatpush1.msra.mxu0 0.0
        %1075 = vmatprep.subr.mxu0 0.0
        %1076 = vmatpush1.msra.mxu0 0.0
        %1077 = vmatprep.subr.mxu0 0.0
        %1078 = vmatpush1.msra.mxu0 0.0
        %1079 = vmatprep.subr.mxu0 0.0
        %1080 = vmatpush1.msra.mxu0 0.0
        %1081 = vmatprep.subr.mxu0 0.0
        %1082 = vmatpush1.msra.mxu0 0.0
        %1083 = vmatprep.subr.mxu0 0.0
        %1084 = vmatpush1.msra.mxu0 0.0
        %1085 = vmatprep.subr.mxu0 0.0
        %1086 = vmatpush1.msra.mxu0 0.0
        %1087 = vmatprep.subr.mxu0 0.0
        %1088 = vmatpush1.msra.mxu0 0.0
        %1089 = vmatprep.mubr.f32.mxu0 0.0
        %1090 = vmatmul.mubr.f32.gmra.mrb[0].mxu0 %v481
        %v1091 = vpop.f32.mrb[0].mxu0
        %v1092 = vadd.f32 0.0, %v1091
        %v1093 = vpop.f32.mrb[0].mxu0
        %v1094 = vadd.f32 0.0, %v1093
        %1095 = vmatprep.mubr.f32.mxu0 0.0
        %1096 = vmatmul.mubr.f32.gmra.mrb[0].mxu0 %v484
        %v1097 = vpop.f32.mrb[0].mxu0
        %v1098 = vadd.f32 0.0, %v1097
        %v1099 = vpop.f32.mrb[0].mxu0
        %v1100 = vadd.f32 0.0, %v1099
        %1101 = vdwg.mxu0
        %vm1102 = vcmask 261120
        %v1104 = vsel %vm1102, %v475, 0
        %v1107 = vsel %vm1102, %v476, 0
        %1109 = vmatprep.subr.mxu0 %v364
        %1110 = vmatpush1.msra.mxu0 %v363
        %1111 = vmatprep.subr.mxu0 %v380
        %1112 = vmatpush1.msra.mxu0 %v379
        %1113 = vmatprep.subr.mxu0 %v396
        %1114 = vmatpush1.msra.mxu0 %v395
        %1115 = vmatprep.subr.mxu0 %v412
        %1116 = vmatpush1.msra.mxu0 %v411
        %1117 = vmatprep.subr.mxu0 0.0
        %1118 = vmatpush1.msra.mxu0 0.0
        %1119 = vmatprep.subr.mxu0 0.0
        %1120 = vmatpush1.msra.mxu0 0.0
        %1121 = vmatprep.subr.mxu0 0.0
        %1122 = vmatpush1.msra.mxu0 0.0
        %1123 = vmatprep.subr.mxu0 0.0
        %1124 = vmatpush1.msra.mxu0 0.0
        %1125 = vmatprep.subr.mxu0 0.0
        %1126 = vmatpush1.msra.mxu0 0.0
        %1127 = vmatprep.subr.mxu0 0.0
        %1128 = vmatpush1.msra.mxu0 0.0
        %1129 = vmatprep.subr.mxu0 0.0
        %1130 = vmatpush1.msra.mxu0 0.0
        %1131 = vmatprep.subr.mxu0 0.0
        %1132 = vmatpush1.msra.mxu0 0.0
        %1133 = vmatprep.subr.mxu0 0.0
        %1134 = vmatpush1.msra.mxu0 0.0
        %1135 = vmatprep.subr.mxu0 0.0
        %1136 = vmatpush1.msra.mxu0 0.0
        %1137 = vmatprep.subr.mxu0 0.0
        %1138 = vmatpush1.msra.mxu0 0.0
        %1139 = vmatprep.subr.mxu0 0.0
        %1140 = vmatpush1.msra.mxu0 0.0
        %1141 = vmatprep.subr.mxu0 0.0
        %1142 = vmatpush1.msra.mxu0 0.0
        %1143 = vmatprep.subr.mxu0 0.0
        %1144 = vmatpush1.msra.mxu0 0.0
        %1145 = vmatprep.subr.mxu0 0.0
        %1146 = vmatpush1.msra.mxu0 0.0
        %1147 = vmatprep.subr.mxu0 0.0
        %1148 = vmatpush1.msra.mxu0 0.0
        %1149 = vmatprep.subr.mxu0 0.0
        %1150 = vmatpush1.msra.mxu0 0.0
        %1151 = vmatprep.subr.mxu0 0.0
        %1152 = vmatpush1.msra.mxu0 0.0
        %1153 = vmatprep.subr.mxu0 0.0
        %1154 = vmatpush1.msra.mxu0 0.0
        %1155 = vmatprep.subr.mxu0 0.0
        %1156 = vmatpush1.msra.mxu0 0.0
        %1157 = vmatprep.subr.mxu0 0.0
        %1158 = vmatpush1.msra.mxu0 0.0
        %1159 = vmatprep.subr.mxu0 0.0
        %1160 = vmatpush1.msra.mxu0 0.0
        %1161 = vmatprep.subr.mxu0 0.0
        %1162 = vmatpush1.msra.mxu0 0.0
        %1163 = vmatprep.subr.mxu0 0.0
        %1164 = vmatpush1.msra.mxu0 0.0
        %1165 = vmatprep.subr.mxu0 0.0
        %1166 = vmatpush1.msra.mxu0 0.0
        %1167 = vmatprep.subr.mxu0 0.0
        %1168 = vmatpush1.msra.mxu0 0.0
        %1169 = vmatprep.subr.mxu0 0.0
        %1170 = vmatpush1.msra.mxu0 0.0
        %1171 = vmatprep.subr.mxu0 0.0
        %1172 = vmatpush1.msra.mxu0 0.0
        %1173 = vmatprep.mubr.f32.mxu0 0.0
        %1174 = vmatmul.mubr.f32.gmra.mrb[0].mxu0 %v1104
        %v1175 = vpop.f32.mrb[0].mxu0
        %v1176 = vadd.f32 %v553, %v1175
        %v1177 = vpop.f32.mrb[0].mxu0
        %v1178 = vadd.f32 %v555, %v1177
        %1179 = vmatprep.mubr.f32.mxu0 0.0
        %1180 = vmatmul.mubr.f32.gmra.mrb[0].mxu0 %v1107
        %v1181 = vpop.f32.mrb[0].mxu0
        %v1182 = vadd.f32 %v559, %v1181
        %v1183 = vpop.f32.mrb[0].mxu0
        %v1184 = vadd.f32 %v561, %v1183
        %1185 = vdwg.mxu0
        %1186 = vmatprep.subr.mxu0 %v366
        %1187 = vmatpush1.msra.mxu0 %v365
        %1188 = vmatprep.subr.mxu0 %v382
        %1189 = vmatpush1.msra.mxu0 %v381
        %1190 = vmatprep.subr.mxu0 %v398
        %1191 = vmatpush1.msra.mxu0 %v397
        %1192 = vmatprep.subr.mxu0 %v414
        %1193 = vmatpush1.msra.mxu0 %v413
        %1194 = vmatprep.subr.mxu0 0.0
        %1195 = vmatpush1.msra.mxu0 0.0
        %1196 = vmatprep.subr.mxu0 0.0
        %1197 = vmatpush1.msra.mxu0 0.0
        %1198 = vmatprep.subr.mxu0 0.0
        %1199 = vmatpush1.msra.mxu0 0.0
        %1200 = vmatprep.subr.mxu0 0.0
        %1201 = vmatpush1.msra.mxu0 0.0
        %1202 = vmatprep.subr.mxu0 0.0
        %1203 = vmatpush1.msra.mxu0 0.0
        %1204 = vmatprep.subr.mxu0 0.0
        %1205 = vmatpush1.msra.mxu0 0.0
        %1206 = vmatprep.subr.mxu0 0.0
        %1207 = vmatpush1.msra.mxu0 0.0
        %1208 = vmatprep.subr.mxu0 0.0
        %1209 = vmatpush1.msra.mxu0 0.0
        %1210 = vmatprep.subr.mxu0 0.0
        %1211 = vmatpush1.msra.mxu0 0.0
        %1212 = vmatprep.subr.mxu0 0.0
        %1213 = vmatpush1.msra.mxu0 0.0
        %1214 = vmatprep.subr.mxu0 0.0
        %1215 = vmatpush1.msra.mxu0 0.0
        %1216 = vmatprep.subr.mxu0 0.0
        %1217 = vmatpush1.msra.mxu0 0.0
        %1218 = vmatprep.subr.mxu0 0.0
        %1219 = vmatpush1.msra.mxu0 0.0
        %1220 = vmatprep.subr.mxu0 0.0
        %1221 = vmatpush1.msra.mxu0 0.0
        %1222 = vmatprep.subr.mxu0 0.0
        %1223 = vmatpush1.msra.mxu0 0.0
        %1224 = vmatprep.subr.mxu0 0.0
        %1225 = vmatpush1.msra.mxu0 0.0
        %1226 = vmatprep.subr.mxu0 0.0
        %1227 = vmatpush1.msra.mxu0 0.0
        %1228 = vmatprep.subr.mxu0 0.0
        %1229 = vmatpush1.msra.mxu0 0.0
        %1230 = vmatprep.subr.mxu0 0.0
        %1231 = vmatpush1.msra.mxu0 0.0
        %1232 = vmatprep.subr.mxu0 0.0
        %1233 = vmatpush1.msra.mxu0 0.0
        %1234 = vmatprep.subr.mxu0 0.0
        %1235 = vmatpush1.msra.mxu0 0.0
        %1236 = vmatprep.subr.mxu0 0.0
        %1237 = vmatpush1.msra.mxu0 0.0
        %1238 = vmatprep.subr.mxu0 0.0
        %1239 = vmatpush1.msra.mxu0 0.0
        %1240 = vmatprep.subr.mxu0 0.0
        %1241 = vmatpush1.msra.mxu0 0.0
        %1242 = vmatprep.subr.mxu0 0.0
        %1243 = vmatpush1.msra.mxu0 0.0
        %1244 = vmatprep.subr.mxu0 0.0
        %1245 = vmatpush1.msra.mxu0 0.0
        %1246 = vmatprep.subr.mxu0 0.0
        %1247 = vmatpush1.msra.mxu0 0.0
        %1248 = vmatprep.subr.mxu0 0.0
        %1249 = vmatpush1.msra.mxu0 0.0
        %1250 = vmatprep.mubr.f32.mxu0 0.0
        %1251 = vmatmul.mubr.f32.gmra.mrb[0].mxu0 %v1104
        %v1252 = vpop.f32.mrb[0].mxu0
        %v1253 = vadd.f32 %v630, %v1252
        %v1254 = vpop.f32.mrb[0].mxu0
        %v1255 = vadd.f32 %v632, %v1254
        %1256 = vmatprep.mubr.f32.mxu0 0.0
        %1257 = vmatmul.mubr.f32.gmra.mrb[0].mxu0 %v1107
        %v1258 = vpop.f32.mrb[0].mxu0
        %v1259 = vadd.f32 %v636, %v1258
        %v1260 = vpop.f32.mrb[0].mxu0
        %v1261 = vadd.f32 %v638, %v1260
        %1262 = vdwg.mxu0
        %1263 = vmatprep.subr.mxu0 %v368
        %1264 = vmatpush1.msra.mxu0 %v367
        %1265 = vmatprep.subr.mxu0 %v384
        %1266 = vmatpush1.msra.mxu0 %v383
        %1267 = vmatprep.subr.mxu0 %v400
        %1268 = vmatpush1.msra.mxu0 %v399
        %1269 = vmatprep.subr.mxu0 %v416
        %1270 = vmatpush1.msra.mxu0 %v415
        %1271 = vmatprep.subr.mxu0 0.0
        %1272 = vmatpush1.msra.mxu0 0.0
        %1273 = vmatprep.subr.mxu0 0.0
        %1274 = vmatpush1.msra.mxu0 0.0
        %1275 = vmatprep.subr.mxu0 0.0
        %1276 = vmatpush1.msra.mxu0 0.0
        %1277 = vmatprep.subr.mxu0 0.0
        %1278 = vmatpush1.msra.mxu0 0.0
        %1279 = vmatprep.subr.mxu0 0.0
        %1280 = vmatpush1.msra.mxu0 0.0
        %1281 = vmatprep.subr.mxu0 0.0
        %1282 = vmatpush1.msra.mxu0 0.0
        %1283 = vmatprep.subr.mxu0 0.0
        %1284 = vmatpush1.msra.mxu0 0.0
        %1285 = vmatprep.subr.mxu0 0.0
        %1286 = vmatpush1.msra.mxu0 0.0
        %1287 = vmatprep.subr.mxu0 0.0
        %1288 = vmatpush1.msra.mxu0 0.0
        %1289 = vmatprep.subr.mxu0 0.0
        %1290 = vmatpush1.msra.mxu0 0.0
        %1291 = vmatprep.subr.mxu0 0.0
        %1292 = vmatpush1.msra.mxu0 0.0
        %1293 = vmatprep.subr.mxu0 0.0
        %1294 = vmatpush1.msra.mxu0 0.0
        %1295 = vmatprep.subr.mxu0 0.0
        %1296 = vmatpush1.msra.mxu0 0.0
        %1297 = vmatprep.subr.mxu0 0.0
        %1298 = vmatpush1.msra.mxu0 0.0
        %1299 = vmatprep.subr.mxu0 0.0
        %1300 = vmatpush1.msra.mxu0 0.0
        %1301 = vmatprep.subr.mxu0 0.0
        %1302 = vmatpush1.msra.mxu0 0.0
        %1303 = vmatprep.subr.mxu0 0.0
        %1304 = vmatpush1.msra.mxu0 0.0
        %1305 = vmatprep.subr.mxu0 0.0
        %1306 = vmatpush1.msra.mxu0 0.0
        %1307 = vmatprep.subr.mxu0 0.0
        %1308 = vmatpush1.msra.mxu0 0.0
        %1309 = vmatprep.subr.mxu0 0.0
        %1310 = vmatpush1.msra.mxu0 0.0
        %1311 = vmatprep.subr.mxu0 0.0
        %1312 = vmatpush1.msra.mxu0 0.0
        %1313 = vmatprep.subr.mxu0 0.0
        %1314 = vmatpush1.msra.mxu0 0.0
        %1315 = vmatprep.subr.mxu0 0.0
        %1316 = vmatpush1.msra.mxu0 0.0
        %1317 = vmatprep.subr.mxu0 0.0
        %1318 = vmatpush1.msra.mxu0 0.0
        %1319 = vmatprep.subr.mxu0 0.0
        %1320 = vmatpush1.msra.mxu0 0.0
        %1321 = vmatprep.subr.mxu0 0.0
        %1322 = vmatpush1.msra.mxu0 0.0
        %1323 = vmatprep.subr.mxu0 0.0
        %1324 = vmatpush1.msra.mxu0 0.0
        %1325 = vmatprep.subr.mxu0 0.0
        %1326 = vmatpush1.msra.mxu0 0.0
        %1327 = vmatprep.mubr.f32.mxu0 0.0
        %1328 = vmatmul.mubr.f32.gmra.mrb[0].mxu0 %v1104
        %v1329 = vpop.f32.mrb[0].mxu0
        %v1330 = vadd.f32 %v707, %v1329
        %v1331 = vpop.f32.mrb[0].mxu0
        %v1332 = vadd.f32 %v709, %v1331
        %1333 = vmatprep.mubr.f32.mxu0 0.0
        %1334 = vmatmul.mubr.f32.gmra.mrb[0].mxu0 %v1107
        %v1335 = vpop.f32.mrb[0].mxu0
        %v1336 = vadd.f32 %v713, %v1335
        %v1337 = vpop.f32.mrb[0].mxu0
        %v1338 = vadd.f32 %v715, %v1337
        %1339 = vdwg.mxu0
        %1340 = vmatprep.subr.mxu0 %v370
        %1341 = vmatpush1.msra.mxu0 %v369
        %1342 = vmatprep.subr.mxu0 %v386
        %1343 = vmatpush1.msra.mxu0 %v385
        %1344 = vmatprep.subr.mxu0 %v402
        %1345 = vmatpush1.msra.mxu0 %v401
        %1346 = vmatprep.subr.mxu0 %v418
        %1347 = vmatpush1.msra.mxu0 %v417
        %1348 = vmatprep.subr.mxu0 0.0
        %1349 = vmatpush1.msra.mxu0 0.0
        %1350 = vmatprep.subr.mxu0 0.0
        %1351 = vmatpush1.msra.mxu0 0.0
        %1352 = vmatprep.subr.mxu0 0.0
        %1353 = vmatpush1.msra.mxu0 0.0
        %1354 = vmatprep.subr.mxu0 0.0
        %1355 = vmatpush1.msra.mxu0 0.0
        %1356 = vmatprep.subr.mxu0 0.0
        %1357 = vmatpush1.msra.mxu0 0.0
        %1358 = vmatprep.subr.mxu0 0.0
        %1359 = vmatpush1.msra.mxu0 0.0
        %1360 = vmatprep.subr.mxu0 0.0
        %1361 = vmatpush1.msra.mxu0 0.0
        %1362 = vmatprep.subr.mxu0 0.0
        %1363 = vmatpush1.msra.mxu0 0.0
        %1364 = vmatprep.subr.mxu0 0.0
        %1365 = vmatpush1.msra.mxu0 0.0
        %1366 = vmatprep.subr.mxu0 0.0
        %1367 = vmatpush1.msra.mxu0 0.0
        %1368 = vmatprep.subr.mxu0 0.0
        %1369 = vmatpush1.msra.mxu0 0.0
        %1370 = vmatprep.subr.mxu0 0.0
        %1371 = vmatpush1.msra.mxu0 0.0
        %1372 = vmatprep.subr.mxu0 0.0
        %1373 = vmatpush1.msra.mxu0 0.0
        %1374 = vmatprep.subr.mxu0 0.0
        %1375 = vmatpush1.msra.mxu0 0.0
        %1376 = vmatprep.subr.mxu0 0.0
        %1377 = vmatpush1.msra.mxu0 0.0
        %1378 = vmatprep.subr.mxu0 0.0
        %1379 = vmatpush1.msra.mxu0 0.0
        %1380 = vmatprep.subr.mxu0 0.0
        %1381 = vmatpush1.msra.mxu0 0.0
        %1382 = vmatprep.subr.mxu0 0.0
        %1383 = vmatpush1.msra.mxu0 0.0
        %1384 = vmatprep.subr.mxu0 0.0
        %1385 = vmatpush1.msra.mxu0 0.0
        %1386 = vmatprep.subr.mxu0 0.0
        %1387 = vmatpush1.msra.mxu0 0.0
        %1388 = vmatprep.subr.mxu0 0.0
        %1389 = vmatpush1.msra.mxu0 0.0
        %1390 = vmatprep.subr.mxu0 0.0
        %1391 = vmatpush1.msra.mxu0 0.0
        %1392 = vmatprep.subr.mxu0 0.0
        %1393 = vmatpush1.msra.mxu0 0.0
        %1394 = vmatprep.subr.mxu0 0.0
        %1395 = vmatpush1.msra.mxu0 0.0
        %1396 = vmatprep.subr.mxu0 0.0
        %1397 = vmatpush1.msra.mxu0 0.0
        %1398 = vmatprep.subr.mxu0 0.0
        %1399 = vmatpush1.msra.mxu0 0.0
        %1400 = vmatprep.subr.mxu0 0.0
        %1401 = vmatpush1.msra.mxu0 0.0
        %1402 = vmatprep.subr.mxu0 0.0
        %1403 = vmatpush1.msra.mxu0 0.0
        %1404 = vmatprep.mubr.f32.mxu0 0.0
        %1405 = vmatmul.mubr.f32.gmra.mrb[0].mxu0 %v1104
        %v1406 = vpop.f32.mrb[0].mxu0
        %v1407 = vadd.f32 %v784, %v1406
        %v1408 = vpop.f32.mrb[0].mxu0
        %v1409 = vadd.f32 %v786, %v1408
        %1410 = vmatprep.mubr.f32.mxu0 0.0
        %1411 = vmatmul.mubr.f32.gmra.mrb[0].mxu0 %v1107
        %v1412 = vpop.f32.mrb[0].mxu0
        %v1413 = vadd.f32 %v790, %v1412
        %v1414 = vpop.f32.mrb[0].mxu0
        %v1415 = vadd.f32 %v792, %v1414
        %1416 = vdwg.mxu0
        %1417 = vmatprep.subr.mxu0 %v372
        %1418 = vmatpush1.msra.mxu0 %v371
        %1419 = vmatprep.subr.mxu0 %v388
        %1420 = vmatpush1.msra.mxu0 %v387
        %1421 = vmatprep.subr.mxu0 %v404
        %1422 = vmatpush1.msra.mxu0 %v403
        %1423 = vmatprep.subr.mxu0 %v420
        %1424 = vmatpush1.msra.mxu0 %v419
        %1425 = vmatprep.subr.mxu0 0.0
        %1426 = vmatpush1.msra.mxu0 0.0
        %1427 = vmatprep.subr.mxu0 0.0
        %1428 = vmatpush1.msra.mxu0 0.0
        %1429 = vmatprep.subr.mxu0 0.0
        %1430 = vmatpush1.msra.mxu0 0.0
        %1431 = vmatprep.subr.mxu0 0.0
        %1432 = vmatpush1.msra.mxu0 0.0
        %1433 = vmatprep.subr.mxu0 0.0
        %1434 = vmatpush1.msra.mxu0 0.0
        %1435 = vmatprep.subr.mxu0 0.0
        %1436 = vmatpush1.msra.mxu0 0.0
        %1437 = vmatprep.subr.mxu0 0.0
        %1438 = vmatpush1.msra.mxu0 0.0
        %1439 = vmatprep.subr.mxu0 0.0
        %1440 = vmatpush1.msra.mxu0 0.0
        %1441 = vmatprep.subr.mxu0 0.0
        %1442 = vmatpush1.msra.mxu0 0.0
        %1443 = vmatprep.subr.mxu0 0.0
        %1444 = vmatpush1.msra.mxu0 0.0
        %1445 = vmatprep.subr.mxu0 0.0
        %1446 = vmatpush1.msra.mxu0 0.0
        %1447 = vmatprep.subr.mxu0 0.0
        %1448 = vmatpush1.msra.mxu0 0.0
        %1449 = vmatprep.subr.mxu0 0.0
        %1450 = vmatpush1.msra.mxu0 0.0
        %1451 = vmatprep.subr.mxu0 0.0
        %1452 = vmatpush1.msra.mxu0 0.0
        %1453 = vmatprep.subr.mxu0 0.0
        %1454 = vmatpush1.msra.mxu0 0.0
        %1455 = vmatprep.subr.mxu0 0.0
        %1456 = vmatpush1.msra.mxu0 0.0
        %1457 = vmatprep.subr.mxu0 0.0
        %1458 = vmatpush1.msra.mxu0 0.0
        %1459 = vmatprep.subr.mxu0 0.0
        %1460 = vmatpush1.msra.mxu0 0.0
        %1461 = vmatprep.subr.mxu0 0.0
        %1462 = vmatpush1.msra.mxu0 0.0
        %1463 = vmatprep.subr.mxu0 0.0
        %1464 = vmatpush1.msra.mxu0 0.0
        %1465 = vmatprep.subr.mxu0 0.0
        %1466 = vmatpush1.msra.mxu0 0.0
        %1467 = vmatprep.subr.mxu0 0.0
        %1468 = vmatpush1.msra.mxu0 0.0
        %1469 = vmatprep.subr.mxu0 0.0
        %1470 = vmatpush1.msra.mxu0 0.0
        %1471 = vmatprep.subr.mxu0 0.0
        %1472 = vmatpush1.msra.mxu0 0.0
        %1473 = vmatprep.subr.mxu0 0.0
        %1474 = vmatpush1.msra.mxu0 0.0
        %1475 = vmatprep.subr.mxu0 0.0
        %1476 = vmatpush1.msra.mxu0 0.0
        %1477 = vmatprep.subr.mxu0 0.0
        %1478 = vmatpush1.msra.mxu0 0.0
        %1479 = vmatprep.subr.mxu0 0.0
        %1480 = vmatpush1.msra.mxu0 0.0
        %1481 = vmatprep.mubr.f32.mxu0 0.0
        %1482 = vmatmul.mubr.f32.gmra.mrb[0].mxu0 %v1104
        %v1483 = vpop.f32.mrb[0].mxu0
        %v1484 = vadd.f32 %v861, %v1483
        %v1485 = vpop.f32.mrb[0].mxu0
        %v1486 = vadd.f32 %v863, %v1485
        %1487 = vmatprep.mubr.f32.mxu0 0.0
        %1488 = vmatmul.mubr.f32.gmra.mrb[0].mxu0 %v1107
        %v1489 = vpop.f32.mrb[0].mxu0
        %v1490 = vadd.f32 %v867, %v1489
        %v1491 = vpop.f32.mrb[0].mxu0
        %v1492 = vadd.f32 %v869, %v1491
        %1493 = vdwg.mxu0
        %1494 = vmatprep.subr.mxu0 %v374
        %1495 = vmatpush1.msra.mxu0 %v373
        %1496 = vmatprep.subr.mxu0 %v390
        %1497 = vmatpush1.msra.mxu0 %v389
        %1498 = vmatprep.subr.mxu0 %v406
        %1499 = vmatpush1.msra.mxu0 %v405
        %1500 = vmatprep.subr.mxu0 %v422
        %1501 = vmatpush1.msra.mxu0 %v421
        %1502 = vmatprep.subr.mxu0 0.0
        %1503 = vmatpush1.msra.mxu0 0.0
        %1504 = vmatprep.subr.mxu0 0.0
        %1505 = vmatpush1.msra.mxu0 0.0
        %1506 = vmatprep.subr.mxu0 0.0
        %1507 = vmatpush1.msra.mxu0 0.0
        %1508 = vmatprep.subr.mxu0 0.0
        %1509 = vmatpush1.msra.mxu0 0.0
        %1510 = vmatprep.subr.mxu0 0.0
        %1511 = vmatpush1.msra.mxu0 0.0
        %1512 = vmatprep.subr.mxu0 0.0
        %1513 = vmatpush1.msra.mxu0 0.0
        %1514 = vmatprep.subr.mxu0 0.0
        %1515 = vmatpush1.msra.mxu0 0.0
        %1516 = vmatprep.subr.mxu0 0.0
        %1517 = vmatpush1.msra.mxu0 0.0
        %1518 = vmatprep.subr.mxu0 0.0
        %1519 = vmatpush1.msra.mxu0 0.0
        %1520 = vmatprep.subr.mxu0 0.0
        %1521 = vmatpush1.msra.mxu0 0.0
        %1522 = vmatprep.subr.mxu0 0.0
        %1523 = vmatpush1.msra.mxu0 0.0
        %1524 = vmatprep.subr.mxu0 0.0
        %1525 = vmatpush1.msra.mxu0 0.0
        %1526 = vmatprep.subr.mxu0 0.0
        %1527 = vmatpush1.msra.mxu0 0.0
        %1528 = vmatprep.subr.mxu0 0.0
        %1529 = vmatpush1.msra.mxu0 0.0
        %1530 = vmatprep.subr.mxu0 0.0
        %1531 = vmatpush1.msra.mxu0 0.0
        %1532 = vmatprep.subr.mxu0 0.0
        %1533 = vmatpush1.msra.mxu0 0.0
        %1534 = vmatprep.subr.mxu0 0.0
        %1535 = vmatpush1.msra.mxu0 0.0
        %1536 = vmatprep.subr.mxu0 0.0
        %1537 = vmatpush1.msra.mxu0 0.0
        %1538 = vmatprep.subr.mxu0 0.0
        %1539 = vmatpush1.msra.mxu0 0.0
        %1540 = vmatprep.subr.mxu0 0.0
        %1541 = vmatpush1.msra.mxu0 0.0
        %1542 = vmatprep.subr.mxu0 0.0
        %1543 = vmatpush1.msra.mxu0 0.0
        %1544 = vmatprep.subr.mxu0 0.0
        %1545 = vmatpush1.msra.mxu0 0.0
        %1546 = vmatprep.subr.mxu0 0.0
        %1547 = vmatpush1.msra.mxu0 0.0
        %1548 = vmatprep.subr.mxu0 0.0
        %1549 = vmatpush1.msra.mxu0 0.0
        %1550 = vmatprep.subr.mxu0 0.0
        %1551 = vmatpush1.msra.mxu0 0.0
        %1552 = vmatprep.subr.mxu0 0.0
        %1553 = vmatpush1.msra.mxu0 0.0
        %1554 = vmatprep.subr.mxu0 0.0
        %1555 = vmatpush1.msra.mxu0 0.0
        %1556 = vmatprep.subr.mxu0 0.0
        %1557 = vmatpush1.msra.mxu0 0.0
        %1558 = vmatprep.mubr.f32.mxu0 0.0
        %1559 = vmatmul.mubr.f32.gmra.mrb[0].mxu0 %v1104
        %v1560 = vpop.f32.mrb[0].mxu0
        %v1561 = vadd.f32 %v938, %v1560
        %v1562 = vpop.f32.mrb[0].mxu0
        %v1563 = vadd.f32 %v940, %v1562
        %1564 = vmatprep.mubr.f32.mxu0 0.0
        %1565 = vmatmul.mubr.f32.gmra.mrb[0].mxu0 %v1107
        %v1566 = vpop.f32.mrb[0].mxu0
        %v1567 = vadd.f32 %v944, %v1566
        %v1568 = vpop.f32.mrb[0].mxu0
        %v1569 = vadd.f32 %v946, %v1568
        %1570 = vdwg.mxu0
        %1571 = vmatprep.subr.mxu0 %v376
        %1572 = vmatpush1.msra.mxu0 %v375
        %1573 = vmatprep.subr.mxu0 %v392
        %1574 = vmatpush1.msra.mxu0 %v391
        %1575 = vmatprep.subr.mxu0 %v408
        %1576 = vmatpush1.msra.mxu0 %v407
        %1577 = vmatprep.subr.mxu0 %v424
        %1578 = vmatpush1.msra.mxu0 %v423
        %1579 = vmatprep.subr.mxu0 0.0
        %1580 = vmatpush1.msra.mxu0 0.0
        %1581 = vmatprep.subr.mxu0 0.0
        %1582 = vmatpush1.msra.mxu0 0.0
        %1583 = vmatprep.subr.mxu0 0.0
        %1584 = vmatpush1.msra.mxu0 0.0
        %1585 = vmatprep.subr.mxu0 0.0
        %1586 = vmatpush1.msra.mxu0 0.0
        %1587 = vmatprep.subr.mxu0 0.0
        %1588 = vmatpush1.msra.mxu0 0.0
        %1589 = vmatprep.subr.mxu0 0.0
        %1590 = vmatpush1.msra.mxu0 0.0
        %1591 = vmatprep.subr.mxu0 0.0
        %1592 = vmatpush1.msra.mxu0 0.0
        %1593 = vmatprep.subr.mxu0 0.0
        %1594 = vmatpush1.msra.mxu0 0.0
        %1595 = vmatprep.subr.mxu0 0.0
        %1596 = vmatpush1.msra.mxu0 0.0
        %1597 = vmatprep.subr.mxu0 0.0
        %1598 = vmatpush1.msra.mxu0 0.0
        %1599 = vmatprep.subr.mxu0 0.0
        %1600 = vmatpush1.msra.mxu0 0.0
        %1601 = vmatprep.subr.mxu0 0.0
        %1602 = vmatpush1.msra.mxu0 0.0
        %1603 = vmatprep.subr.mxu0 0.0
        %1604 = vmatpush1.msra.mxu0 0.0
        %1605 = vmatprep.subr.mxu0 0.0
        %1606 = vmatpush1.msra.mxu0 0.0
        %1607 = vmatprep.subr.mxu0 0.0
        %1608 = vmatpush1.msra.mxu0 0.0
        %1609 = vmatprep.subr.mxu0 0.0
        %1610 = vmatpush1.msra.mxu0 0.0
        %1611 = vmatprep.subr.mxu0 0.0
        %1612 = vmatpush1.msra.mxu0 0.0
        %1613 = vmatprep.subr.mxu0 0.0
        %1614 = vmatpush1.msra.mxu0 0.0
        %1615 = vmatprep.subr.mxu0 0.0
        %1616 = vmatpush1.msra.mxu0 0.0
        %1617 = vmatprep.subr.mxu0 0.0
        %1618 = vmatpush1.msra.mxu0 0.0
        %1619 = vmatprep.subr.mxu0 0.0
        %1620 = vmatpush1.msra.mxu0 0.0
        %1621 = vmatprep.subr.mxu0 0.0
        %1622 = vmatpush1.msra.mxu0 0.0
        %1623 = vmatprep.subr.mxu0 0.0
        %1624 = vmatpush1.msra.mxu0 0.0
        %1625 = vmatprep.subr.mxu0 0.0
        %1626 = vmatpush1.msra.mxu0 0.0
        %1627 = vmatprep.subr.mxu0 0.0
        %1628 = vmatpush1.msra.mxu0 0.0
        %1629 = vmatprep.subr.mxu0 0.0
        %1630 = vmatpush1.msra.mxu0 0.0
        %1631 = vmatprep.subr.mxu0 0.0
        %1632 = vmatpush1.msra.mxu0 0.0
        %1633 = vmatprep.subr.mxu0 0.0
        %1634 = vmatpush1.msra.mxu0 0.0
        %1635 = vmatprep.mubr.f32.mxu0 0.0
        %1636 = vmatmul.mubr.f32.gmra.mrb[0].mxu0 %v1104
        %v1637 = vpop.f32.mrb[0].mxu0
        %v1638 = vadd.f32 %v1015, %v1637
        %v1639 = vpop.f32.mrb[0].mxu0
        %v1640 = vadd.f32 %v1017, %v1639
        %1641 = vmatprep.mubr.f32.mxu0 0.0
        %1642 = vmatmul.mubr.f32.gmra.mrb[0].mxu0 %v1107
        %v1643 = vpop.f32.mrb[0].mxu0
        %v1644 = vadd.f32 %v1021, %v1643
        %v1645 = vpop.f32.mrb[0].mxu0
        %v1646 = vadd.f32 %v1023, %v1645
        %1647 = vdwg.mxu0
        %1648 = vmatprep.subr.mxu0 %v378
        %1649 = vmatpush1.msra.mxu0 %v377
        %1650 = vmatprep.subr.mxu0 %v394
        %1651 = vmatpush1.msra.mxu0 %v393
        %1652 = vmatprep.subr.mxu0 %v410
        %1653 = vmatpush1.msra.mxu0 %v409
        %1654 = vmatprep.subr.mxu0 %v426
        %1655 = vmatpush1.msra.mxu0 %v425
        %1656 = vmatprep.subr.mxu0 0.0
        %1657 = vmatpush1.msra.mxu0 0.0
        %1658 = vmatprep.subr.mxu0 0.0
        %1659 = vmatpush1.msra.mxu0 0.0
        %1660 = vmatprep.subr.mxu0 0.0
        %1661 = vmatpush1.msra.mxu0 0.0
        %1662 = vmatprep.subr.mxu0 0.0
        %1663 = vmatpush1.msra.mxu0 0.0
        %1664 = vmatprep.subr.mxu0 0.0
        %1665 = vmatpush1.msra.mxu0 0.0
        %1666 = vmatprep.subr.mxu0 0.0
        %1667 = vmatpush1.msra.mxu0 0.0
        %1668 = vmatprep.subr.mxu0 0.0
        %1669 = vmatpush1.msra.mxu0 0.0
        %1670 = vmatprep.subr.mxu0 0.0
        %1671 = vmatpush1.msra.mxu0 0.0
        %1672 = vmatprep.subr.mxu0 0.0
        %1673 = vmatpush1.msra.mxu0 0.0
        %1674 = vmatprep.subr.mxu0 0.0
        %1675 = vmatpush1.msra.mxu0 0.0
        %1676 = vmatprep.subr.mxu0 0.0
        %1677 = vmatpush1.msra.mxu0 0.0
        %1678 = vmatprep.subr.mxu0 0.0
        %1679 = vmatpush1.msra.mxu0 0.0
        %1680 = vmatprep.subr.mxu0 0.0
        %1681 = vmatpush1.msra.mxu0 0.0
        %1682 = vmatprep.subr.mxu0 0.0
        %1683 = vmatpush1.msra.mxu0 0.0
        %1684 = vmatprep.subr.mxu0 0.0
        %1685 = vmatpush1.msra.mxu0 0.0
        %1686 = vmatprep.subr.mxu0 0.0
        %1687 = vmatpush1.msra.mxu0 0.0
        %1688 = vmatprep.subr.mxu0 0.0
        %1689 = vmatpush1.msra.mxu0 0.0
        %1690 = vmatprep.subr.mxu0 0.0
        %1691 = vmatpush1.msra.mxu0 0.0
        %1692 = vmatprep.subr.mxu0 0.0
        %1693 = vmatpush1.msra.mxu0 0.0
        %1694 = vmatprep.subr.mxu0 0.0
        %1695 = vmatpush1.msra.mxu0 0.0
        %1696 = vmatprep.subr.mxu0 0.0
        %1697 = vmatpush1.msra.mxu0 0.0
        %1698 = vmatprep.subr.mxu0 0.0
        %1699 = vmatpush1.msra.mxu0 0.0
        %1700 = vmatprep.subr.mxu0 0.0
        %1701 = vmatpush1.msra.mxu0 0.0
        %1702 = vmatprep.subr.mxu0 0.0
        %1703 = vmatpush1.msra.mxu0 0.0
        %1704 = vmatprep.subr.mxu0 0.0
        %1705 = vmatpush1.msra.mxu0 0.0
        %1706 = vmatprep.subr.mxu0 0.0
        %1707 = vmatpush1.msra.mxu0 0.0
        %1708 = vmatprep.subr.mxu0 0.0
        %1709 = vmatpush1.msra.mxu0 0.0
        %1710 = vmatprep.subr.mxu0 0.0
        %1711 = vmatpush1.msra.mxu0 0.0
        %1712 = vmatprep.mubr.f32.mxu0 0.0
        %1713 = vmatmul.mubr.f32.gmra.mrb[0].mxu0 %v1104
        %v1714 = vpop.f32.mrb[0].mxu0
        %v1715 = vadd.f32 %v1092, %v1714
        %v1716 = vpop.f32.mrb[0].mxu0
        %v1717 = vadd.f32 %v1094, %v1716
        %1718 = vmatprep.mubr.f32.mxu0 0.0
        %1719 = vmatmul.mubr.f32.gmra.mrb[0].mxu0 %v1107
        %v1720 = vpop.f32.mrb[0].mxu0
        %v1721 = vadd.f32 %v1098, %v1720
        %v1722 = vpop.f32.mrb[0].mxu0
        %v1723 = vadd.f32 %v1100, %v1722
        %1724 = vdwg.mxu0
        %v1725 = vld [vmem:[%s4] sm:$0xff]
        %v1726 = vld [vmem:[%s4 + $0x8] sm:$0xff]
        %1728 = vset.pattern.permute.xlu0 0
        %1729 = vperm.xlu0 %1728, %v1725
        %v1730 = vpop.permute.xlu0 %1729
        %1733 = vset.pattern.permute.xlu0 0
        %1734 = vperm.xlu0 %1733, %v1726
        %v1735 = vpop.permute.xlu0 %1734
        %v1737 = vadd.f32 %v1176, %v1730
        %v1738 = vadd.f32 %v1178, %v1730
        %v1739 = vadd.f32 %v1253, %v1730
        %v1740 = vadd.f32 %v1255, %v1730
        %v1741 = vadd.f32 %v1330, %v1730
        %v1742 = vadd.f32 %v1332, %v1730
        %v1743 = vadd.f32 %v1407, %v1730
        %v1744 = vadd.f32 %v1409, %v1730
        %v1745 = vadd.f32 %v1484, %v1730
        %v1746 = vadd.f32 %v1486, %v1730
        %v1747 = vadd.f32 %v1561, %v1730
        %v1748 = vadd.f32 %v1563, %v1730
        %v1749 = vadd.f32 %v1638, %v1730
        %v1750 = vadd.f32 %v1640, %v1730
        %v1751 = vadd.f32 %v1715, %v1730
        %v1752 = vadd.f32 %v1717, %v1730
        %v1753 = vadd.f32 %v1182, %v1735
        %v1754 = vadd.f32 %v1184, %v1735
        %v1755 = vadd.f32 %v1259, %v1735
        %v1756 = vadd.f32 %v1261, %v1735
        %v1757 = vadd.f32 %v1336, %v1735
        %v1758 = vadd.f32 %v1338, %v1735
        %v1759 = vadd.f32 %v1413, %v1735
        %v1760 = vadd.f32 %v1415, %v1735
        %v1761 = vadd.f32 %v1490, %v1735
        %v1762 = vadd.f32 %v1492, %v1735
        %v1763 = vadd.f32 %v1567, %v1735
        %v1764 = vadd.f32 %v1569, %v1735
        %v1765 = vadd.f32 %v1644, %v1735
        %v1766 = vadd.f32 %v1646, %v1735
        %v1767 = vadd.f32 %v1721, %v1735
        %v1768 = vadd.f32 %v1723, %v1735
        %v1769 = vmax.f32 %v1737, 0.0
        %v1770 = vmax.f32 %v1738, 0.0
        %v1771 = vmax.f32 %v1739, 0.0
        %v1772 = vmax.f32 %v1740, 0.0
        %v1773 = vmax.f32 %v1741, 0.0
        %v1774 = vmax.f32 %v1742, 0.0
        %v1775 = vmax.f32 %v1743, 0.0
        %v1776 = vmax.f32 %v1744, 0.0
        %v1777 = vmax.f32 %v1745, 0.0
        %v1778 = vmax.f32 %v1746, 0.0
        %v1779 = vmax.f32 %v1747, 0.0
        %v1780 = vmax.f32 %v1748, 0.0
        %v1781 = vmax.f32 %v1749, 0.0
        %v1782 = vmax.f32 %v1750, 0.0
        %v1783 = vmax.f32 %v1751, 0.0
        %v1784 = vmax.f32 %v1752, 0.0
        %v1785 = vmax.f32 %v1753, 0.0
        %v1786 = vmax.f32 %v1754, 0.0
        %v1787 = vmax.f32 %v1755, 0.0
        %v1788 = vmax.f32 %v1756, 0.0
        %v1789 = vmax.f32 %v1757, 0.0
        %v1790 = vmax.f32 %v1758, 0.0
        %v1791 = vmax.f32 %v1759, 0.0
        %v1792 = vmax.f32 %v1760, 0.0
        %v1793 = vmax.f32 %v1761, 0.0
        %v1794 = vmax.f32 %v1762, 0.0
        %v1795 = vmax.f32 %v1763, 0.0
        %v1796 = vmax.f32 %v1764, 0.0
        %v1797 = vmax.f32 %v1765, 0.0
        %v1798 = vmax.f32 %v1766, 0.0
        %v1799 = vmax.f32 %v1767, 0.0
        %v1800 = vmax.f32 %v1768, 0.0
        %v1801 = vld [vmem:[%s5] sm:$0xff]
        %v1802 = vld [vmem:[%s5 + $0x8] sm:$0xff]
        %1804 = vset.pattern.permute.xlu0 0
        %1805 = vperm.xlu0 %1804, %v1801
        %v1806 = vpop.permute.xlu0 %1805
        %1809 = vset.pattern.permute.xlu0 0
        %1810 = vperm.xlu0 %1809, %v1802
        %v1811 = vpop.permute.xlu0 %1810
        %v1813 = vmul.f32 %v1769, %v1806
        %v1814 = vmul.f32 %v1770, %v1806
        %v1815 = vmul.f32 %v1771, %v1806
        %v1816 = vmul.f32 %v1772, %v1806
        %v1817 = vmul.f32 %v1773, %v1806
        %v1818 = vmul.f32 %v1774, %v1806
        %v1819 = vmul.f32 %v1775, %v1806
        %v1820 = vmul.f32 %v1776, %v1806
        %v1821 = vmul.f32 %v1777, %v1806
        %v1822 = vmul.f32 %v1778, %v1806
        %v1823 = vmul.f32 %v1779, %v1806
        %v1824 = vmul.f32 %v1780, %v1806
        %v1825 = vmul.f32 %v1781, %v1806
        %v1826 = vmul.f32 %v1782, %v1806
        %v1827 = vmul.f32 %v1783, %v1806
        %v1828 = vmul.f32 %v1784, %v1806
        %v1829 = vmul.f32 %v1785, %v1811
        %v1830 = vmul.f32 %v1786, %v1811
        %v1831 = vmul.f32 %v1787, %v1811
        %v1832 = vmul.f32 %v1788, %v1811
        %v1833 = vmul.f32 %v1789, %v1811
        %v1834 = vmul.f32 %v1790, %v1811
        %v1835 = vmul.f32 %v1791, %v1811
        %v1836 = vmul.f32 %v1792, %v1811
        %v1837 = vmul.f32 %v1793, %v1811
        %v1838 = vmul.f32 %v1794, %v1811
        %v1839 = vmul.f32 %v1795, %v1811
        %v1840 = vmul.f32 %v1796, %v1811
        %v1841 = vmul.f32 %v1797, %v1811
        %v1842 = vmul.f32 %v1798, %v1811
        %v1843 = vmul.f32 %v1799, %v1811
        %v1844 = vmul.f32 %v1800, %v1811
        %v1845 = vadd.f32 %v1813, %v1829
        %v1846 = vrot.slane %v1845, 4
        %v1847 = vadd.f32 %v1845, %v1846
        %v1848 = vrot.slane %v1847, 2
        %v1849 = vadd.f32 %v1847, %v1848
        %v1850 = vrot.slane %v1849, 1
        %v1851 = vadd.f32 %v1849, %v1850
        %v1852 = vadd.f32 %v1814, %v1830
        %v1853 = vrot.slane %v1852, 4
        %v1854 = vadd.f32 %v1852, %v1853
        %v1855 = vrot.slane %v1854, 2
        %v1856 = vadd.f32 %v1854, %v1855
        %v1857 = vrot.slane %v1856, 1
        %v1858 = vadd.f32 %v1856, %v1857
        %v1859 = vadd.f32 %v1815, %v1831
        %v1860 = vrot.slane %v1859, 4
        %v1861 = vadd.f32 %v1859, %v1860
        %v1862 = vrot.slane %v1861, 2
        %v1863 = vadd.f32 %v1861, %v1862
        %v1864 = vrot.slane %v1863, 1
        %v1865 = vadd.f32 %v1863, %v1864
        %v1866 = vadd.f32 %v1816, %v1832
        %v1867 = vrot.slane %v1866, 4
        %v1868 = vadd.f32 %v1866, %v1867
        %v1869 = vrot.slane %v1868, 2
        %v1870 = vadd.f32 %v1868, %v1869
        %v1871 = vrot.slane %v1870, 1
        %v1872 = vadd.f32 %v1870, %v1871
        %v1873 = vadd.f32 %v1817, %v1833
        %v1874 = vrot.slane %v1873, 4
        %v1875 = vadd.f32 %v1873, %v1874
        %v1876 = vrot.slane %v1875, 2
        %v1877 = vadd.f32 %v1875, %v1876
        %v1878 = vrot.slane %v1877, 1
        %v1879 = vadd.f32 %v1877, %v1878
        %v1880 = vadd.f32 %v1818, %v1834
        %v1881 = vrot.slane %v1880, 4
        %v1882 = vadd.f32 %v1880, %v1881
        %v1883 = vrot.slane %v1882, 2
        %v1884 = vadd.f32 %v1882, %v1883
        %v1885 = vrot.slane %v1884, 1
        %v1886 = vadd.f32 %v1884, %v1885
        %v1887 = vadd.f32 %v1819, %v1835
        %v1888 = vrot.slane %v1887, 4
        %v1889 = vadd.f32 %v1887, %v1888
        %v1890 = vrot.slane %v1889, 2
        %v1891 = vadd.f32 %v1889, %v1890
        %v1892 = vrot.slane %v1891, 1
        %v1893 = vadd.f32 %v1891, %v1892
        %v1894 = vadd.f32 %v1820, %v1836
        %v1895 = vrot.slane %v1894, 4
        %v1896 = vadd.f32 %v1894, %v1895
        %v1897 = vrot.slane %v1896, 2
        %v1898 = vadd.f32 %v1896, %v1897
        %v1899 = vrot.slane %v1898, 1
        %v1900 = vadd.f32 %v1898, %v1899
        %v1901 = vadd.f32 %v1821, %v1837
        %v1902 = vrot.slane %v1901, 4
        %v1903 = vadd.f32 %v1901, %v1902
        %v1904 = vrot.slane %v1903, 2
        %v1905 = vadd.f32 %v1903, %v1904
        %v1906 = vrot.slane %v1905, 1
        %v1907 = vadd.f32 %v1905, %v1906
        %v1908 = vadd.f32 %v1822, %v1838
        %v1909 = vrot.slane %v1908, 4
        %v1910 = vadd.f32 %v1908, %v1909
        %v1911 = vrot.slane %v1910, 2
        %v1912 = vadd.f32 %v1910, %v1911
        %v1913 = vrot.slane %v1912, 1
        %v1914 = vadd.f32 %v1912, %v1913
        %v1915 = vadd.f32 %v1823, %v1839
        %v1916 = vrot.slane %v1915, 4
        %v1917 = vadd.f32 %v1915, %v1916
        %v1918 = vrot.slane %v1917, 2
        %v1919 = vadd.f32 %v1917, %v1918
        %v1920 = vrot.slane %v1919, 1
        %v1921 = vadd.f32 %v1919, %v1920
        %v1922 = vadd.f32 %v1824, %v1840
        %v1923 = vrot.slane %v1922, 4
        %v1924 = vadd.f32 %v1922, %v1923
        %v1925 = vrot.slane %v1924, 2
        %v1926 = vadd.f32 %v1924, %v1925
        %v1927 = vrot.slane %v1926, 1
        %v1928 = vadd.f32 %v1926, %v1927
        %v1929 = vadd.f32 %v1825, %v1841
        %v1930 = vrot.slane %v1929, 4
        %v1931 = vadd.f32 %v1929, %v1930
        %v1932 = vrot.slane %v1931, 2
        %v1933 = vadd.f32 %v1931, %v1932
        %v1934 = vrot.slane %v1933, 1
        %v1935 = vadd.f32 %v1933, %v1934
        %v1936 = vadd.f32 %v1826, %v1842
        %v1937 = vrot.slane %v1936, 4
        %v1938 = vadd.f32 %v1936, %v1937
        %v1939 = vrot.slane %v1938, 2
        %v1940 = vadd.f32 %v1938, %v1939
        %v1941 = vrot.slane %v1940, 1
        %v1942 = vadd.f32 %v1940, %v1941
        %v1943 = vadd.f32 %v1827, %v1843
        %v1944 = vrot.slane %v1943, 4
        %v1945 = vadd.f32 %v1943, %v1944
        %v1946 = vrot.slane %v1945, 2
        %v1947 = vadd.f32 %v1945, %v1946
        %v1948 = vrot.slane %v1947, 1
        %v1949 = vadd.f32 %v1947, %v1948
        %v1950 = vadd.f32 %v1828, %v1844
        %v1951 = vrot.slane %v1950, 4
        %v1952 = vadd.f32 %v1950, %v1951
        %v1953 = vrot.slane %v1952, 2
        %v1954 = vadd.f32 %v1952, %v1953
        %v1955 = vrot.slane %v1954, 1
        %v1956 = vadd.f32 %v1954, %v1955
        %s1957 = sld [smem:[#allocation2]]
        %v1958 = vstv %s1957
        %v1959 = vadd.f32 %v1851, %v1958
        %v1960 = vadd.f32 %v1858, %v1958
        %v1961 = vadd.f32 %v1865, %v1958
        %v1962 = vadd.f32 %v1872, %v1958
        %v1963 = vadd.f32 %v1879, %v1958
        %v1964 = vadd.f32 %v1886, %v1958
        %v1965 = vadd.f32 %v1893, %v1958
        %v1966 = vadd.f32 %v1900, %v1958
        %v1967 = vadd.f32 %v1907, %v1958
        %v1968 = vadd.f32 %v1914, %v1958
        %v1969 = vadd.f32 %v1921, %v1958
        %v1970 = vadd.f32 %v1928, %v1958
        %v1971 = vadd.f32 %v1935, %v1958
        %v1972 = vadd.f32 %v1942, %v1958
        %v1973 = vadd.f32 %v1949, %v1958
        %v1974 = vadd.f32 %v1956, %v1958
        %v1975 = vsub.f32 0.0, %v1959
        %v1976 = vsub.f32 0.0, %v1960
        %v1977 = vsub.f32 0.0, %v1961
        %v1978 = vsub.f32 0.0, %v1962
        %v1979 = vsub.f32 0.0, %v1963
        %v1980 = vsub.f32 0.0, %v1964
        %v1981 = vsub.f32 0.0, %v1965
        %v1982 = vsub.f32 0.0, %v1966
        %v1983 = vsub.f32 0.0, %v1967
        %v1984 = vsub.f32 0.0, %v1968
        %v1985 = vsub.f32 0.0, %v1969
        %v1986 = vsub.f32 0.0, %v1970
        %v1987 = vsub.f32 0.0, %v1971
        %v1988 = vsub.f32 0.0, %v1972
        %v1989 = vsub.f32 0.0, %v1973
        %v1990 = vsub.f32 0.0, %v1974
        %v1991 = vmul.f32 %v1975, 1.442695
        %v1992 = vpow.pop %v1991
        %v1993 = vmul.f32 %v1976, 1.442695
        %v1994 = vpow.pop %v1993
        %v1995 = vmul.f32 %v1977, 1.442695
        %v1996 = vpow.pop %v1995
        %v1997 = vmul.f32 %v1978, 1.442695
        %v1998 = vpow.pop %v1997
        %v1999 = vmul.f32 %v1979, 1.442695
        %v2000 = vpow.pop %v1999
        %v2001 = vmul.f32 %v1980, 1.442695
        %v2002 = vpow.pop %v2001
        %v2003 = vmul.f32 %v1981, 1.442695
        %v2004 = vpow.pop %v2003
        %v2005 = vmul.f32 %v1982, 1.442695
        %v2006 = vpow.pop %v2005
        %v2007 = vmul.f32 %v1983, 1.442695
        %v2008 = vpow.pop %v2007
        %v2009 = vmul.f32 %v1984, 1.442695
        %v2010 = vpow.pop %v2009
        %v2011 = vmul.f32 %v1985, 1.442695
        %v2012 = vpow.pop %v2011
        %v2013 = vmul.f32 %v1986, 1.442695
        %v2014 = vpow.pop %v2013
        %v2015 = vmul.f32 %v1987, 1.442695
        %v2016 = vpow.pop %v2015
        %v2017 = vmul.f32 %v1988, 1.442695
        %v2018 = vpow.pop %v2017
        %v2019 = vmul.f32 %v1989, 1.442695
        %v2020 = vpow.pop %v2019
        %v2021 = vmul.f32 %v1990, 1.442695
        %v2022 = vpow.pop %v2021
        %v2023 = vadd.f32 %v1992, 1.0
        %v2024 = vadd.f32 %v1994, 1.0
        %v2025 = vadd.f32 %v1996, 1.0
        %v2026 = vadd.f32 %v1998, 1.0
        %v2027 = vadd.f32 %v2000, 1.0
        %v2028 = vadd.f32 %v2002, 1.0
        %v2029 = vadd.f32 %v2004, 1.0
        %v2030 = vadd.f32 %v2006, 1.0
        %v2031 = vadd.f32 %v2008, 1.0
        %v2032 = vadd.f32 %v2010, 1.0
        %v2033 = vadd.f32 %v2012, 1.0
        %v2034 = vadd.f32 %v2014, 1.0
        %v2035 = vadd.f32 %v2016, 1.0
        %v2036 = vadd.f32 %v2018, 1.0
        %v2037 = vadd.f32 %v2020, 1.0
        %v2038 = vadd.f32 %v2022, 1.0
        %v2039 = vrcp.pop %v2023
        %v2040 = vrcp.pop %v2024
        %v2041 = vrcp.pop %v2025
        %v2042 = vrcp.pop %v2026
        %v2043 = vrcp.pop %v2027
        %v2044 = vrcp.pop %v2028
        %v2045 = vrcp.pop %v2029
        %v2046 = vrcp.pop %v2030
        %v2047 = vrcp.pop %v2031
        %v2048 = vrcp.pop %v2032
        %v2049 = vrcp.pop %v2033
        %v2050 = vrcp.pop %v2034
        %v2051 = vrcp.pop %v2035
        %v2052 = vrcp.pop %v2036
        %v2053 = vrcp.pop %v2037
        %v2054 = vrcp.pop %v2038
        %v2055 = vmul.f32 %v427, %v2039
        %v2056 = vmul.f32 %v428, %v2040
        %v2057 = vmul.f32 %v429, %v2041
        %v2058 = vmul.f32 %v430, %v2042
        %v2059 = vmul.f32 %v431, %v2043
        %v2060 = vmul.f32 %v432, %v2044
        %v2061 = vmul.f32 %v433, %v2045
        %v2062 = vmul.f32 %v434, %v2046
        %v2063 = vmul.f32 %v435, %v2047
        %v2064 = vmul.f32 %v436, %v2048
        %v2065 = vmul.f32 %v437, %v2049
        %v2066 = vmul.f32 %v438, %v2050
        %v2067 = vmul.f32 %v439, %v2051
        %v2068 = vmul.f32 %v440, %v2052
        %v2069 = vmul.f32 %v441, %v2053
        %v2070 = vmul.f32 %v442, %v2054
        %v2071 = vmul.f32 %v443, %v2039
        %v2072 = vmul.f32 %v444, %v2040
        %v2073 = vmul.f32 %v445, %v2041
        %v2074 = vmul.f32 %v446, %v2042
        %v2075 = vmul.f32 %v447, %v2043
        %v2076 = vmul.f32 %v448, %v2044
        %v2077 = vmul.f32 %v449, %v2045
        %v2078 = vmul.f32 %v450, %v2046
        %v2079 = vmul.f32 %v451, %v2047
        %v2080 = vmul.f32 %v452, %v2048
        %v2081 = vmul.f32 %v453, %v2049
        %v2082 = vmul.f32 %v454, %v2050
        %v2083 = vmul.f32 %v455, %v2051
        %v2084 = vmul.f32 %v456, %v2052
        %v2085 = vmul.f32 %v457, %v2053
        %v2086 = vmul.f32 %v458, %v2054
        %v2087 = vmul.f32 %v459, %v2039
        %v2088 = vmul.f32 %v460, %v2040
        %v2089 = vmul.f32 %v461, %v2041
        %v2090 = vmul.f32 %v462, %v2042
        %v2091 = vmul.f32 %v463, %v2043
        %v2092 = vmul.f32 %v464, %v2044
        %v2093 = vmul.f32 %v465, %v2045
        %v2094 = vmul.f32 %v466, %v2046
        %v2095 = vmul.f32 %v467, %v2047
        %v2096 = vmul.f32 %v468, %v2048
        %v2097 = vmul.f32 %v469, %v2049
        %v2098 = vmul.f32 %v470, %v2050
        %v2099 = vmul.f32 %v471, %v2051
        %v2100 = vmul.f32 %v472, %v2052
        %v2101 = vmul.f32 %v473, %v2053
        %v2102 = vmul.f32 %v474, %v2054
        %2103 = vst [vmem:[%s359] sm:$0xff] %v2055
        %2104 = vst [vmem:[%s359 + $0x8] sm:$0xff] %v2056
        %2105 = vst [vmem:[%s359 + $0x10] sm:$0xff] %v2057
        %2106 = vst [vmem:[%s359 + $0x18] sm:$0xff] %v2058
        %2107 = vst [vmem:[%s359 + $0x20] sm:$0xff] %v2059
        %2108 = vst [vmem:[%s359 + $0x28] sm:$0xff] %v2060
        %2109 = vst [vmem:[%s359 + $0x30] sm:$0xff] %v2061
        %2110 = vst [vmem:[%s359 + $0x38] sm:$0xff] %v2062
        %2111 = vst [vmem:[%s359 + $0x40] sm:$0xff] %v2063
        %2112 = vst [vmem:[%s359 + $0x48] sm:$0xff] %v2064
        %2113 = vst [vmem:[%s359 + $0x50] sm:$0xff] %v2065
        %2114 = vst [vmem:[%s359 + $0x58] sm:$0xff] %v2066
        %2115 = vst [vmem:[%s359 + $0x60] sm:$0xff] %v2067
        %2116 = vst [vmem:[%s359 + $0x68] sm:$0xff] %v2068
        %2117 = vst [vmem:[%s359 + $0x70] sm:$0xff] %v2069
        %2118 = vst [vmem:[%s359 + $0x78] sm:$0xff] %v2070
        %2119 = vst [vmem:[%s359 + $0x80] sm:$0xff] %v2071
        %2120 = vst [vmem:[%s359 + $0x88] sm:$0xff] %v2072
        %2121 = vst [vmem:[%s359 + $0x90] sm:$0xff] %v2073
        %2122 = vst [vmem:[%s359 + $0x98] sm:$0xff] %v2074
        %2123 = vst [vmem:[%s359 + $0xa0] sm:$0xff] %v2075
        %2124 = vst [vmem:[%s359 + $0xa8] sm:$0xff] %v2076
        %2125 = vst [vmem:[%s359 + $0xb0] sm:$0xff] %v2077
        %2126 = vst [vmem:[%s359 + $0xb8] sm:$0xff] %v2078
        %2127 = vst [vmem:[%s359 + $0xc0] sm:$0xff] %v2079
        %2128 = vst [vmem:[%s359 + $0xc8] sm:$0xff] %v2080
        %2129 = vst [vmem:[%s359 + $0xd0] sm:$0xff] %v2081
        %2130 = vst [vmem:[%s359 + $0xd8] sm:$0xff] %v2082
        %2131 = vst [vmem:[%s359 + $0xe0] sm:$0xff] %v2083
        %2132 = vst [vmem:[%s359 + $0xe8] sm:$0xff] %v2084
        %2133 = vst [vmem:[%s359 + $0xf0] sm:$0xff] %v2085
        %2134 = vst [vmem:[%s359 + $0xf8] sm:$0xff] %v2086
        %2135 = vst [vmem:[%s359 + $0x100] sm:$0xff] %v2087
        %2136 = vst [vmem:[%s359 + $0x108] sm:$0xff] %v2088
        %2137 = vst [vmem:[%s359 + $0x110] sm:$0xff] %v2089
        %2138 = vst [vmem:[%s359 + $0x118] sm:$0xff] %v2090
        %2139 = vst [vmem:[%s359 + $0x120] sm:$0xff] %v2091
        %2140 = vst [vmem:[%s359 + $0x128] sm:$0xff] %v2092
        %2141 = vst [vmem:[%s359 + $0x130] sm:$0xff] %v2093
        %2142 = vst [vmem:[%s359 + $0x138] sm:$0xff] %v2094
        %2143 = vst [vmem:[%s359 + $0x140] sm:$0xff] %v2095
        %2144 = vst [vmem:[%s359 + $0x148] sm:$0xff] %v2096
        %2145 = vst [vmem:[%s359 + $0x150] sm:$0xff] %v2097
        %2146 = vst [vmem:[%s359 + $0x158] sm:$0xff] %v2098
        %2147 = vst [vmem:[%s359 + $0x160] sm:$0xff] %v2099
        %2148 = vst [vmem:[%s359 + $0x168] sm:$0xff] %v2100
        %2149 = vst [vmem:[%s359 + $0x170] sm:$0xff] %v2101
        %2150 = vst [vmem:[%s359 + $0x178] sm:$0xff] %v2102
        %s2151 = sand.u32 %s211, 1
        %s2152 = scalar_lea.sflag [#allocation5], %s2151
        %s2153 = sand.u32 %s211, 1
        %s2154 = smul.addr %s2153, 384
        %s2155 = scalar_lea.vmem [#allocation8], %s2154
        // Predicated region
        $region57: #{tpu_custom_call.1} parent=47 // pred_check
          %p2156 = pneg %p221
        $region58: #{tpu_custom_call.1} parent=47 // pred_check_branch
          %2158 = sbr.rel (%p2156) target = $region60
        $region59: #{tpu_custom_call.1} parent=47 // pred_region
          %s2159 = smul.u32 16, %s33
          %s2161 = ssub.s32 6144, 6144
          %2162 = vsyncadd %s2152, %s2161
          %s2163 = smul.addr %s32, 96
          %s2164 = sadd.s32 %s2159, %s2163
          %s2165 = smul.addr %s2164, 128
          %s2166 = scalar_lea.hbm %s7, %s2165
          %s2167 = sshll.u32 %s2155, 4
          %s2168 = int_to_ptr.vmem [resolvable:$true] %s2167
          %2173 = dma.vmem_to_hbm [thread:$0]  %s2168, 6144, %s2166, %s2152, 2048, 4096, 128
        $region60: #{tpu_custom_call.1} parent=47 // pred_fallthru
          _
      $region48: #{tpu_custom_call.1} parent=5 // pred_fallthru
        _
      %p2174 = scmp.le.s32.totalorder 2, %s23
      // Predicated region
      $region61: #{tpu_custom_call.1} parent=5 // pred_check
        %p2175 = pneg %p2174
      $region62: #{tpu_custom_call.1} parent=5 // pred_check_branch
        %2177 = sbr.rel (%p2175) target = $region64
      $region63: #{tpu_custom_call.1} parent=5 // pred_region
        %s2178 = ssub.s32 %s23, 2
        // Predicated region
        $region65: #{tpu_custom_call.1} parent=63 // pred_check
          %p2179 = pneg %p227
        $region66: #{tpu_custom_call.1} parent=63 // pred_check_branch
          %2181 = sbr.rel (%p2179) target = $region68
        $region67: #{tpu_custom_call.1} parent=63 // pred_region
          %s2182 = sand.u32 %s212, 1
          %s2183 = scalar_lea.sflag [#allocation5], %s2182
          %s2184 = sand.u32 %s212, 1
          %s2185 = smul.addr %s2184, 384
          %s2186 = scalar_lea.vmem [#allocation8], %s2185
          %2187 = dma.done %s2183, 6144
        $region68: #{tpu_custom_call.1} parent=63 // pred_fallthru
          _
      $region64: #{tpu_custom_call.1} parent=5 // pred_fallthru
        _
    $region6: #{tpu_custom_call.1} parent=1 // loop_footer
      %s27 = sadd.s32 1, %s23
    $region7: #{tpu_custom_call.1} parent=1 // loop_footer_branch
      %22 = sbr.rel target = $region3
    $region8: #{tpu_custom_call.1} parent=1 // loop_exit
      _
    %2188 = vsyncpa [#allocation4], 1
    %s2189 = scalar_lea.sflag [#allocation4], 1
    %2190 = vsyncpa %s2189, 1
    %2191 = vsyncpa [#allocation7], 1
    %s2192 = scalar_lea.sflag [#allocation7], 1
    %2193 = vsyncpa %s2192, 1
    %2194 = vsyncpa [#allocation5], 1
    %s2195 = scalar_lea.sflag [#allocation5], 1
    %2196 = vsyncpa %s2195, 1

</llo_original>
